<compile_context>
chip_gen: v6e
topology: v6e:2x2x1
jax: 0.10.0
libtpu: 0.0.40
codegen_flags: <defaults>
</compile_context>

<pallas_src>
import math
import functools

import jax
import jax.numpy as jnp
from jax import lax
from jax.experimental import pallas as pl
from jax.experimental.pallas import tpu as pltpu

# --- hyperparameters (module globals in the PyTorch source) ----------------
N_EMBED    = 32                      # n_embed
NUM_HEADS  = 4
HEAD_SIZE  = N_EMBED // NUM_HEADS    # 8
BLOCK_SIZE = 8                       # block_size (== T in the example)
DROPOUT    = 0.0                     # eval-mode dropout == identity


def mha_kernel(x_ref, wqkv_ref, wp_ref, bp_ref, o_ref,
               *, num_heads, head_size):
    """One grid step = one batch element.

    x_ref    : (T, C)   this batch element's tokens
    wqkv_ref : (C, 3C)  fused q/k/v projection weights (no bias)
    wp_ref   : (C, C)   output projection weight (x @ W layout)
    bp_ref   : (1, C)   output projection bias
    o_ref    : (T, C)   output
    """
    x = x_ref[...]                                   # (T, C), already f32
    T, C = x.shape
    # NOTE: the PyTorch module intentionally scales by n_embed**-0.5 (C=32),
    # not head_size**-0.5 -- we reproduce that exactly.
    scale = jnp.float32(C) ** -0.5

    # Fused QKV projection: one MXU matmul instead of three.
    qkv = jnp.dot(x, wqkv_ref[...], preferred_element_type=jnp.float32)  # (T, 3C)
    # 32-lane-aligned splits first; heads are sub-sliced from these.
    q = qkv[:, :C]
    k = qkv[:, C:2 * C]
    v = qkv[:, 2 * C:]

    # Causal additive bias, computed ONCE (hoisted out of the head loop).
    # -1e30 (finite) is safe: the diagonal guarantees >=1 unmasked entry/row.
    row = lax.broadcasted_iota(jnp.int32, (T, T), 0)
    col = lax.broadcasted_iota(jnp.int32, (T, T), 1)
    bias = jnp.where(col <= row, jnp.float32(0.0), jnp.float32(-1e30))

    wp = wp_ref[...]                                 # (C, C)

    # Per-head attention, folding each head's output straight into the output
    # projection (no concatenated-heads scratch slab, no partial-lane stores).
    acc = jnp.zeros((T, C), jnp.float32)
    for h in range(num_heads):                       # small static unroll
        lo = h * head_size
        hi = lo + head_size
        qh = q[:, lo:hi]
        kh = k[:, lo:hi]
        vh = v[:, lo:hi]

        # q @ k^T with no explicit transpose (contract last dims directly).
        wei = lax.dot_general(qh, kh, (((1,), (1,)), ((), ())),
                              preferred_element_type=jnp.float32)
        wei = wei * scale + bias
        wei = jnp.exp(wei - jnp.max(wei, axis=-1, keepdims=True))
        wei = wei / jnp.sum(wei, axis=-1, keepdims=True)   # exact divide

        head_out = jnp.dot(wei, vh, preferred_element_type=jnp.float32)   # (T, hs)
        acc = acc + jnp.dot(head_out, wp[lo:hi, :],
                            preferred_element_type=jnp.float32)

    o_ref[...] = (acc + bp_ref[...]).astype(o_ref.dtype)


def multi_head_attention(x, wq, wk, wv, wp, bp):
    """x: (B, T, C).  Weights already laid out for x @ W (i.e. PyTorch W.T)."""
    B, T, C = x.shape
    x2 = x.reshape(B * T, C)                          # lane-contiguous slab
    wqkv = jnp.concatenate([wq, wk, wv], axis=1)      # (C, 3C) fused projection
    bp2 = bp.reshape(1, C)

    kernel = functools.partial(
        mha_kernel, num_heads=NUM_HEADS, head_size=HEAD_SIZE)

    out = pl.pallas_call(
        kernel,
        out_shape=jax.ShapeDtypeStruct((B * T, C), x.dtype),
        grid_spec=pltpu.PrefetchScalarGridSpec(
            num_scalar_prefetch=0,
            grid=(B,),                                # one step per batch elem
            in_specs=[
                pl.BlockSpec((T, C),     lambda b: (b, 0)),   # x (this batch)
                pl.BlockSpec((C, 3 * C), lambda b: (0, 0)),   # fused wqkv
                pl.BlockSpec((C, C),     lambda b: (0, 0)),   # wp
                pl.BlockSpec((1, C),     lambda b: (0, 0)),   # bp
            ],
            out_specs=pl.BlockSpec((T, C), lambda b: (b, 0)),
        ),
        compiler_params=pltpu.CompilerParams(
            dimension_semantics=("parallel",)),       # both TCs on v7x
    )(x2, wqkv, wp, bp2)
    return out.reshape(B, T, C)


def reference(x, wq, wk, wv, wp, bp):
    """Pure-JAX reference reproducing the PyTorch forward (eval mode)."""
    B, T, C = x.shape
    q = x @ wq
    k = x @ wk
    v = x @ wv
    qh = q.reshape(B, T, NUM_HEADS, HEAD_SIZE).transpose(0, 2, 1, 3)
    kh = k.reshape(B, T, NUM_HEADS, HEAD_SIZE).transpose(0, 2, 1, 3)
    vh = v.reshape(B, T, NUM_HEADS, HEAD_SIZE).transpose(0, 2, 1, 3)
    wei = jnp.einsum("bhqd,bhkd->bhqk", qh, kh) * (C ** -0.5)
    mask = jnp.tril(jnp.ones((T, T), bool))
    wei = jnp.where(mask, wei, -jnp.inf)
    wei = jax.nn.softmax(wei, axis=-1)
    out = jnp.einsum("bhqk,bhkd->bhqd", wei, vh)
    out = out.transpose(0, 2, 1, 3).reshape(B, T, C)
    return out @ wp + bp


if __name__ == "__main__":
    B, T, C = 2, BLOCK_SIZE, N_EMBED

    key = jax.random.PRNGKey(0)
    kx, kq, kk, kv, kp, kb = jax.random.split(key, 6)

    # Deterministic parameter init (Linear-ish scale). Weights stored so the
    # kernel computes x @ W  (i.e. the transpose of PyTorch's weight matrix).
    lin_scale = 1.0 / math.sqrt(C)
    x  = jax.random.normal(kx, (B, T, C), dtype=jnp.float32)
    wq = jax.random.uniform(kq, (C, C), jnp.float32, -lin_scale, lin_scale)
    wk = jax.random.uniform(kk, (C, C), jnp.float32, -lin_scale, lin_scale)
    wv = jax.random.uniform(kv, (C, C), jnp.float32, -lin_scale, lin_scale)
    wp = jax.random.uniform(kp, (C, C), jnp.float32, -lin_scale, lin_scale)
    bp = jax.random.uniform(kb, (C,),   jnp.float32, -lin_scale, lin_scale)

    out = multi_head_attention(x, wq, wk, wv, wp, bp)
    out = jax.block_until_ready(out)

    ref = reference(x, wq, wk, wv, wp, bp)
    assert out.shape == (B, T, C)
    # exact softmax divide now -> tight tolerance
    assert jnp.allclose(out, ref, atol=1e-4, rtol=1e-4), "mismatch vs reference"

    print("KERNEL_OK")
</pallas_src>

<mosaic_0001>
module attributes {stable_mosaic.version = 11 : i64} {
  func.func @mha_kernel(%arg0: i32, %arg1: memref<8x32xf32, #tpu.memory_space<vmem>>, %arg2: memref<32x96xf32, #tpu.memory_space<vmem>>, %arg3: memref<32x32xf32, #tpu.memory_space<vmem>>, %arg4: memref<1x32xf32, #tpu.memory_space<vmem>>, %arg5: memref<8x32xf32, #tpu.memory_space<vmem>>) attributes {dimension_semantics = [#tpu.dimension_semantics<parallel>], iteration_bounds = array<i64: 2>, scalar_prefetch = 0 : i64, scratch_operands = 0 : i64, tpu.core_type = #tpu.core_type<tc>, window_params = [{transform_indices = @transform_0, window_bounds = array<i64: 8, 32>}, {pipeline_mode = #tpu.pipeline_mode<synchronous>, transform_indices = @transform_1, window_bounds = array<i64: 32, 96>}, {pipeline_mode = #tpu.pipeline_mode<synchronous>, transform_indices = @transform_2, window_bounds = array<i64: 32, 32>}, {pipeline_mode = #tpu.pipeline_mode<synchronous>, transform_indices = @transform_3, window_bounds = array<i64: 1, 32>}, {transform_indices = @transform_4, window_bounds = array<i64: 8, 32>}]} {
    %c0 = arith.constant 0 : index
    %c0_0 = arith.constant 0 : index
    %0 = vector.load %arg1[%c0, %c0_0] : memref<8x32xf32, #tpu.memory_space<vmem>>, vector<8x32xf32>
    %cst = arith.constant 3.200000e+01 : f32
    %cst_1 = arith.constant -5.000000e-01 : f32
    %1 = math.powf %cst, %cst_1 : f32
    %c0_2 = arith.constant 0 : index
    %c0_3 = arith.constant 0 : index
    %2 = vector.load %arg2[%c0_2, %c0_3] : memref<32x96xf32, #tpu.memory_space<vmem>>, vector<32x96xf32>
    %cst_4 = arith.constant dense<0.000000e+00> : vector<8x96xf32>
    %3 = tpu.matmul %0, %2, %cst_4 {dimension_numbers = #tpu.dot_dimension_numbers<[1], [0], [0], [1], [0, 0, 1, 1], [], []>} : vector<8x32xf32>, vector<32x96xf32>, vector<8x96xf32> -> vector<8x96xf32>
    %4 = vector.extract_strided_slice %3 {offsets = [0, 0], sizes = [8, 32], strides = [1, 1]} : vector<8x96xf32> to vector<8x32xf32>
    %5 = vector.extract_strided_slice %3 {offsets = [0, 32], sizes = [8, 32], strides = [1, 1]} : vector<8x96xf32> to vector<8x32xf32>
    %6 = vector.extract_strided_slice %3 {offsets = [0, 64], sizes = [8, 32], strides = [1, 1]} : vector<8x96xf32> to vector<8x32xf32>
    %7 = tpu.iota {dimensions = array<i32: 0>} : vector<8x8xi32>
    %8 = tpu.iota {dimensions = array<i32: 1>} : vector<8x8xi32>
    %9 = arith.cmpi sle, %8, %7 : vector<8x8xi32>
    %cst_5 = arith.constant 0.000000e+00 : f32
    %cst_6 = arith.constant -1.000000e+30 : f32
    %10 = vector.broadcast %cst_5 : f32 to vector<8x8xf32>
    %11 = vector.broadcast %cst_6 : f32 to vector<8x8xf32>
    %12 = arith.select %9, %10, %11 : vector<8x8xi1>, vector<8x8xf32>
    %c0_7 = arith.constant 0 : index
    %c0_8 = arith.constant 0 : index
    %13 = vector.load %arg3[%c0_7, %c0_8] : memref<32x32xf32, #tpu.memory_space<vmem>>, vector<32x32xf32>
    %cst_9 = arith.constant 0.000000e+00 : f32
    %14 = vector.broadcast %cst_9 : f32 to vector<8x32xf32>
    %15 = vector.extract_strided_slice %4 {offsets = [0, 0], sizes = [8, 8], strides = [1, 1]} : vector<8x32xf32> to vector<8x8xf32>
    %16 = vector.extract_strided_slice %5 {offsets = [0, 0], sizes = [8, 8], strides = [1, 1]} : vector<8x32xf32> to vector<8x8xf32>
    %17 = vector.extract_strided_slice %6 {offsets = [0, 0], sizes = [8, 8], strides = [1, 1]} : vector<8x32xf32> to vector<8x8xf32>
    %cst_10 = arith.constant dense<0.000000e+00> : vector<8x8xf32>
    %18 = tpu.matmul %15, %16, %cst_10 {dimension_numbers = #tpu.dot_dimension_numbers<[1], [1], [0], [0], [0, 0, 1, 0], [], []>} : vector<8x8xf32>, vector<8x8xf32>, vector<8x8xf32> -> vector<8x8xf32>
    %19 = vector.broadcast %1 : f32 to vector<8x8xf32>
    %20 = arith.mulf %18, %19 : vector<8x8xf32>
    %21 = arith.addf %20, %12 : vector<8x8xf32>
    %cst_11 = arith.constant dense<0xFF800000> : vector<8xf32>
    %22 = vector.multi_reduction <maximumf>, %21, %cst_11 [1] : vector<8x8xf32> to vector<8xf32>
    %23 = vector.shape_cast %22 : vector<8xf32> to vector<8x1xf32>
    %24 = vector.broadcast %23 : vector<8x1xf32> to vector<8x8xf32>
    %25 = arith.subf %21, %24 : vector<8x8xf32>
    %26 = math.exp %25 : vector<8x8xf32>
    %cst_12 = arith.constant dense<0.000000e+00> : vector<8xf32>
    %27 = vector.multi_reduction <add>, %26, %cst_12 [1] : vector<8x8xf32> to vector<8xf32>
    %28 = vector.shape_cast %27 : vector<8xf32> to vector<8x1xf32>
    %29 = vector.broadcast %28 : vector<8x1xf32> to vector<8x8xf32>
    %30 = arith.divf %26, %29 : vector<8x8xf32>
    %cst_13 = arith.constant dense<0.000000e+00> : vector<8x8xf32>
    %31 = tpu.matmul %30, %17, %cst_13 {dimension_numbers = #tpu.dot_dimension_numbers<[1], [0], [0], [1], [0, 0, 1, 1], [], []>} : vector<8x8xf32>, vector<8x8xf32>, vector<8x8xf32> -> vector<8x8xf32>
    %32 = vector.extract_strided_slice %13 {offsets = [0, 0], sizes = [8, 32], strides = [1, 1]} : vector<32x32xf32> to vector<8x32xf32>
    %cst_14 = arith.constant dense<0.000000e+00> : vector<8x32xf32>
    %33 = tpu.matmul %31, %32, %cst_14 {dimension_numbers = #tpu.dot_dimension_numbers<[1], [0], [0], [1], [0, 0, 1, 1], [], []>} : vector<8x8xf32>, vector<8x32xf32>, vector<8x32xf32> -> vector<8x32xf32>
    %34 = arith.addf %14, %33 : vector<8x32xf32>
    %35 = vector.extract_strided_slice %4 {offsets = [0, 8], sizes = [8, 8], strides = [1, 1]} : vector<8x32xf32> to vector<8x8xf32>
    %36 = vector.extract_strided_slice %5 {offsets = [0, 8], sizes = [8, 8], strides = [1, 1]} : vector<8x32xf32> to vector<8x8xf32>
    %37 = vector.extract_strided_slice %6 {offsets = [0, 8], sizes = [8, 8], strides = [1, 1]} : vector<8x32xf32> to vector<8x8xf32>
    %cst_15 = arith.constant dense<0.000000e+00> : vector<8x8xf32>
    %38 = tpu.matmul %35, %36, %cst_15 {dimension_numbers = #tpu.dot_dimension_numbers<[1], [1], [0], [0], [0, 0, 1, 0], [], []>} : vector<8x8xf32>, vector<8x8xf32>, vector<8x8xf32> -> vector<8x8xf32>
    %39 = vector.broadcast %1 : f32 to vector<8x8xf32>
    %40 = arith.mulf %38, %39 : vector<8x8xf32>
    %41 = arith.addf %40, %12 : vector<8x8xf32>
    %cst_16 = arith.constant dense<0xFF800000> : vector<8xf32>
    %42 = vector.multi_reduction <maximumf>, %41, %cst_16 [1] : vector<8x8xf32> to vector<8xf32>
    %43 = vector.shape_cast %42 : vector<8xf32> to vector<8x1xf32>
    %44 = vector.broadcast %43 : vector<8x1xf32> to vector<8x8xf32>
    %45 = arith.subf %41, %44 : vector<8x8xf32>
    %46 = math.exp %45 : vector<8x8xf32>
    %cst_17 = arith.constant dense<0.000000e+00> : vector<8xf32>
    %47 = vector.multi_reduction <add>, %46, %cst_17 [1] : vector<8x8xf32> to vector<8xf32>
    %48 = vector.shape_cast %47 : vector<8xf32> to vector<8x1xf32>
    %49 = vector.broadcast %48 : vector<8x1xf32> to vector<8x8xf32>
    %50 = arith.divf %46, %49 : vector<8x8xf32>
    %cst_18 = arith.constant dense<0.000000e+00> : vector<8x8xf32>
    %51 = tpu.matmul %50, %37, %cst_18 {dimension_numbers = #tpu.dot_dimension_numbers<[1], [0], [0], [1], [0, 0, 1, 1], [], []>} : vector<8x8xf32>, vector<8x8xf32>, vector<8x8xf32> -> vector<8x8xf32>
    %52 = vector.extract_strided_slice %13 {offsets = [8, 0], sizes = [8, 32], strides = [1, 1]} : vector<32x32xf32> to vector<8x32xf32>
    %cst_19 = arith.constant dense<0.000000e+00> : vector<8x32xf32>
    %53 = tpu.matmul %51, %52, %cst_19 {dimension_numbers = #tpu.dot_dimension_numbers<[1], [0], [0], [1], [0, 0, 1, 1], [], []>} : vector<8x8xf32>, vector<8x32xf32>, vector<8x32xf32> -> vector<8x32xf32>
    %54 = arith.addf %34, %53 : vector<8x32xf32>
    %55 = vector.extract_strided_slice %4 {offsets = [0, 16], sizes = [8, 8], strides = [1, 1]} : vector<8x32xf32> to vector<8x8xf32>
    %56 = vector.extract_strided_slice %5 {offsets = [0, 16], sizes = [8, 8], strides = [1, 1]} : vector<8x32xf32> to vector<8x8xf32>
    %57 = vector.extract_strided_slice %6 {offsets = [0, 16], sizes = [8, 8], strides = [1, 1]} : vector<8x32xf32> to vector<8x8xf32>
    %cst_20 = arith.constant dense<0.000000e+00> : vector<8x8xf32>
    %58 = tpu.matmul %55, %56, %cst_20 {dimension_numbers = #tpu.dot_dimension_numbers<[1], [1], [0], [0], [0, 0, 1, 0], [], []>} : vector<8x8xf32>, vector<8x8xf32>, vector<8x8xf32> -> vector<8x8xf32>
    %59 = vector.broadcast %1 : f32 to vector<8x8xf32>
    %60 = arith.mulf %58, %59 : vector<8x8xf32>
    %61 = arith.addf %60, %12 : vector<8x8xf32>
    %cst_21 = arith.constant dense<0xFF800000> : vector<8xf32>
    %62 = vector.multi_reduction <maximumf>, %61, %cst_21 [1] : vector<8x8xf32> to vector<8xf32>
    %63 = vector.shape_cast %62 : vector<8xf32> to vector<8x1xf32>
    %64 = vector.broadcast %63 : vector<8x1xf32> to vector<8x8xf32>
    %65 = arith.subf %61, %64 : vector<8x8xf32>
    %66 = math.exp %65 : vector<8x8xf32>
    %cst_22 = arith.constant dense<0.000000e+00> : vector<8xf32>
    %67 = vector.multi_reduction <add>, %66, %cst_22 [1] : vector<8x8xf32> to vector<8xf32>
    %68 = vector.shape_cast %67 : vector<8xf32> to vector<8x1xf32>
    %69 = vector.broadcast %68 : vector<8x1xf32> to vector<8x8xf32>
    %70 = arith.divf %66, %69 : vector<8x8xf32>
    %cst_23 = arith.constant dense<0.000000e+00> : vector<8x8xf32>
    %71 = tpu.matmul %70, %57, %cst_23 {dimension_numbers = #tpu.dot_dimension_numbers<[1], [0], [0], [1], [0, 0, 1, 1], [], []>} : vector<8x8xf32>, vector<8x8xf32>, vector<8x8xf32> -> vector<8x8xf32>
    %72 = vector.extract_strided_slice %13 {offsets = [16, 0], sizes = [8, 32], strides = [1, 1]} : vector<32x32xf32> to vector<8x32xf32>
    %cst_24 = arith.constant dense<0.000000e+00> : vector<8x32xf32>
    %73 = tpu.matmul %71, %72, %cst_24 {dimension_numbers = #tpu.dot_dimension_numbers<[1], [0], [0], [1], [0, 0, 1, 1], [], []>} : vector<8x8xf32>, vector<8x32xf32>, vector<8x32xf32> -> vector<8x32xf32>
    %74 = arith.addf %54, %73 : vector<8x32xf32>
    %75 = vector.extract_strided_slice %4 {offsets = [0, 24], sizes = [8, 8], strides = [1, 1]} : vector<8x32xf32> to vector<8x8xf32>
    %76 = vector.extract_strided_slice %5 {offsets = [0, 24], sizes = [8, 8], strides = [1, 1]} : vector<8x32xf32> to vector<8x8xf32>
    %77 = vector.extract_strided_slice %6 {offsets = [0, 24], sizes = [8, 8], strides = [1, 1]} : vector<8x32xf32> to vector<8x8xf32>
    %cst_25 = arith.constant dense<0.000000e+00> : vector<8x8xf32>
    %78 = tpu.matmul %75, %76, %cst_25 {dimension_numbers = #tpu.dot_dimension_numbers<[1], [1], [0], [0], [0, 0, 1, 0], [], []>} : vector<8x8xf32>, vector<8x8xf32>, vector<8x8xf32> -> vector<8x8xf32>
    %79 = vector.broadcast %1 : f32 to vector<8x8xf32>
    %80 = arith.mulf %78, %79 : vector<8x8xf32>
    %81 = arith.addf %80, %12 : vector<8x8xf32>
    %cst_26 = arith.constant dense<0xFF800000> : vector<8xf32>
    %82 = vector.multi_reduction <maximumf>, %81, %cst_26 [1] : vector<8x8xf32> to vector<8xf32>
    %83 = vector.shape_cast %82 : vector<8xf32> to vector<8x1xf32>
    %84 = vector.broadcast %83 : vector<8x1xf32> to vector<8x8xf32>
    %85 = arith.subf %81, %84 : vector<8x8xf32>
    %86 = math.exp %85 : vector<8x8xf32>
    %cst_27 = arith.constant dense<0.000000e+00> : vector<8xf32>
    %87 = vector.multi_reduction <add>, %86, %cst_27 [1] : vector<8x8xf32> to vector<8xf32>
    %88 = vector.shape_cast %87 : vector<8xf32> to vector<8x1xf32>
    %89 = vector.broadcast %88 : vector<8x1xf32> to vector<8x8xf32>
    %90 = arith.divf %86, %89 : vector<8x8xf32>
    %cst_28 = arith.constant dense<0.000000e+00> : vector<8x8xf32>
    %91 = tpu.matmul %90, %77, %cst_28 {dimension_numbers = #tpu.dot_dimension_numbers<[1], [0], [0], [1], [0, 0, 1, 1], [], []>} : vector<8x8xf32>, vector<8x8xf32>, vector<8x8xf32> -> vector<8x8xf32>
    %92 = vector.extract_strided_slice %13 {offsets = [24, 0], sizes = [8, 32], strides = [1, 1]} : vector<32x32xf32> to vector<8x32xf32>
    %cst_29 = arith.constant dense<0.000000e+00> : vector<8x32xf32>
    %93 = tpu.matmul %91, %92, %cst_29 {dimension_numbers = #tpu.dot_dimension_numbers<[1], [0], [0], [1], [0, 0, 1, 1], [], []>} : vector<8x8xf32>, vector<8x32xf32>, vector<8x32xf32> -> vector<8x32xf32>
    %94 = arith.addf %74, %93 : vector<8x32xf32>
    %c0_30 = arith.constant 0 : index
    %c0_31 = arith.constant 0 : index
    %95 = vector.load %arg4[%c0_30, %c0_31] : memref<1x32xf32, #tpu.memory_space<vmem>>, vector<1x32xf32>
    %96 = vector.broadcast %95 : vector<1x32xf32> to vector<8x32xf32>
    %97 = arith.addf %94, %96 : vector<8x32xf32>
    %c0_32 = arith.constant 0 : index
    %c0_33 = arith.constant 0 : index
    %98 = vector.load %arg5[%c0_32, %c0_33] : memref<8x32xf32, #tpu.memory_space<vmem>>, vector<8x32xf32>
    tpu.vector_store %arg5[%c0_32, %c0_33], %97 {strides = array<i32>} : memref<8x32xf32, #tpu.memory_space<vmem>>, vector<8x32xf32>,
    return
  }
  func.func @transform_0(%arg0: i32) -> (i32, i32) {
    %c0_i32 = arith.constant 0 : i32
    %c0_i32_0 = arith.constant 0 : i32
    return %arg0, %c0_i32 : i32, i32
  }
  func.func @transform_1(%arg0: i32) -> (i32, i32) {
    %c0_i32 = arith.constant 0 : i32
    %c0_i32_0 = arith.constant 0 : i32
    %c0_i32_1 = arith.constant 0 : i32
    return %c0_i32, %c0_i32_0 : i32, i32
  }
  func.func @transform_2(%arg0: i32) -> (i32, i32) {
    %c0_i32 = arith.constant 0 : i32
    %c0_i32_0 = arith.constant 0 : i32
    %c0_i32_1 = arith.constant 0 : i32
    return %c0_i32, %c0_i32_0 : i32, i32
  }
  func.func @transform_3(%arg0: i32) -> (i32, i32) {
    %c0_i32 = arith.constant 0 : i32
    %c0_i32_0 = arith.constant 0 : i32
    %c0_i32_1 = arith.constant 0 : i32
    return %c0_i32, %c0_i32_0 : i32, i32
  }
  func.func @transform_4(%arg0: i32) -> (i32, i32) {
    %c0_i32 = arith.constant 0 : i32
    %c0_i32_0 = arith.constant 0 : i32
    return %arg0, %c0_i32 : i32, i32
  }
}

</mosaic_0001>

<llo_original>
// kernel: tpu_custom_call.1
$region0: #{tpu_custom_call.1}
  #allocation0 [shape = 'u32[]', space=smem, size = 0x4, offset = 0x4, fixed_abs, tag = 'smem constant byte address 0x4 - core index']
  #allocation1 [shape = 'u32[144,128]{1,0:T(1,128)}', space=vmem, size = 0x12000, scoped, tag = 'internal scratch']
  %s0 = inlined_call_operand.hbm [shape: f32[16,32], index: 0, kind: input, shape index: {}]
  %s1 = inlined_call_operand.hbm [shape: f32[32,96], index: 1, kind: input, shape index: {}]
  %s2 = inlined_call_operand.hbm [shape: f32[32,32], index: 2, kind: input, shape index: {}]
  %s3 = inlined_call_operand.vmem [shape: f32[1,32], index: 3, kind: input, shape index: {}]
  %s4 = inlined_call_operand.hbm [shape: f32[16,32], index: 4, kind: output, shape index: {}]
  %s5 = sld [smem:[#allocation0]]
  $region61: #{tpu_custom_call.1} parent=0
    _
  %s7 = ssub.s32 1, %s5
  %s8 = scalar_select 0, %s7, %s5
  $region1: #{tpu_custom_call.1} parent=0
    #allocation2 [shape = 'u8[8192]{0}', space=vmem, size = 0x2000, scoped, tag = 'input window, operand 0']
    #allocation3 [shape = 's32[2]{0}', space=sflag, size = 0x8, scoped, tag = 'scoped memory for tpu_custom_call.1']
    #allocation4 [shape = 's32[2]{0}', space=sflag, size = 0x8, scoped, tag = 'scoped memory for tpu_custom_call.1']
    #allocation5 [shape = 'u8[16384]{0}', space=vmem, size = 0x4000, scoped, tag = 'input window, operand 1, single buffered']
    #allocation6 [shape = 's32[1]{0}', space=sflag, size = 0x4, scoped, tag = 'scoped memory for tpu_custom_call.1']
    #allocation7 [shape = 'u8[16384]{0}', space=vmem, size = 0x4000, scoped, tag = 'input window, operand 2, single buffered']
    #allocation8 [shape = 'u8[8192]{0}', space=vmem, size = 0x2000, scoped, tag = 'output window, operand 0']
    %9 = vsyncpa [#allocation3], 0
    %s10 = scalar_lea.sflag [#allocation3], 1
    %11 = vsyncpa %s10, 0
    %12 = vsyncpa [#allocation6], 0
    %13 = vsyncpa [#allocation4], 0
    %s14 = scalar_lea.sflag [#allocation4], 1
    %15 = vsyncpa %s14, 0
    loop: start=0, step=1, limit=4
    $region2: #{tpu_custom_call.1} parent=1 // loop_pre_header
      _
    $region3: #{tpu_custom_call.1} parent=1 // loop_header
      %s17 = sphi 0, %s21
      %p18 = scmp.ge.s32.totalorder %s17, 4
      %s27 = sphi 0, %s29
      %s30 = sphi 0, %s27
      %s31 = sphi 0, %s30
      %s47 = sphi 0, %s31
      %s51 = sphi 0, %s51
      %s53 = sphi 0, %s51
      %s54 = sphi 0, %s53
      %s68 = sphi 0, %s54
      %s72 = sphi 0, %s72
      %s74 = sphi 0, %s72
      %s75 = sphi 0, %s74
      %s89 = sphi 0, %s75
      %s93 = sphi 0, %s93
      %s95 = sphi 0, %s93
      %s96 = sphi 0, %s95
      %s110 = sphi 0, %s96
      %s116 = sphi 0, %s118
      %s119 = sphi 0, %s116
      %s120 = sphi 0, %s119
      %s136 = sphi 0, %s120
    $region4: #{tpu_custom_call.1} parent=1 // loop_header_branch
      %20 = sbr.rel (%p18) target = $region8
    $region5: #{tpu_custom_call.1} parent=1 // loop_body
      %s22 = ssub.s32 %s17, 1
      %s23 = ssub.s32 %s17, 2
      %s24 = sadd.s32 %s17, 1
      %s25 = ssub.s32 %s17, %s24
      %p26 = scmp.eq.s32.totalorder %s25, 0
      %s28 = sadd.s32 %s27, 1
      %s29 = scalar_select %p26, %s27, %s28
      %p32 = pneg %p26
      %p33 = scmp.eq.s32.totalorder %s17, 1
      %p34 = por %p32, %p33
      %p35 = scmp.ne.s32.totalorder %s27, %s30
      %p36 = scmp.eq.s32.totalorder %s17, 0
      %p37 = por %p35, %p36
      %p38 = scmp.ne.s32.totalorder %s27, %s30
      %p39 = scmp.eq.s32.totalorder %s22, 1
      %p40 = por %p38, %p39
      %p41 = scmp.ne.s32.totalorder %s30, %s31
      %p42 = scmp.eq.s32.totalorder %s22, 0
      %p43 = por %p41, %p42
      %p44 = scmp.ne.s32.totalorder %s30, %s31
      %p45 = scmp.eq.s32.totalorder %s23, 1
      %p46 = por %p44, %p45
      %p48 = scmp.ne.s32.totalorder %s31, %s47
      %p49 = scmp.eq.s32.totalorder %s23, 0
      %p50 = por %p48, %p49
      %s52 = sadd.s32 %s51, 1
      %p55 = scmp.eq.s32.totalorder %s17, 1
      %p56 = scmp.ne.s32.totalorder %s51, %s53
      %p57 = scmp.eq.s32.totalorder %s17, 0
      %p58 = por %p56, %p57
      %p59 = scmp.ne.s32.totalorder %s51, %s53
      %p60 = scmp.eq.s32.totalorder %s22, 1
      %p61 = por %p59, %p60
      %p62 = scmp.ne.s32.totalorder %s53, %s54
      %p63 = scmp.eq.s32.totalorder %s22, 0
      %p64 = por %p62, %p63
      %p65 = scmp.ne.s32.totalorder %s53, %s54
      %p66 = scmp.eq.s32.totalorder %s23, 1
      %p67 = por %p65, %p66
      %p69 = scmp.ne.s32.totalorder %s54, %s68
      %p70 = scmp.eq.s32.totalorder %s23, 0
      %p71 = por %p69, %p70
      %s73 = sadd.s32 %s72, 1
      %p76 = scmp.eq.s32.totalorder %s17, 1
      %p77 = scmp.ne.s32.totalorder %s72, %s74
      %p78 = scmp.eq.s32.totalorder %s17, 0
      %p79 = por %p77, %p78
      %p80 = scmp.ne.s32.totalorder %s72, %s74
      %p81 = scmp.eq.s32.totalorder %s22, 1
      %p82 = por %p80, %p81
      %p83 = scmp.ne.s32.totalorder %s74, %s75
      %p84 = scmp.eq.s32.totalorder %s22, 0
      %p85 = por %p83, %p84
      %p86 = scmp.ne.s32.totalorder %s74, %s75
      %p87 = scmp.eq.s32.totalorder %s23, 1
      %p88 = por %p86, %p87
      %p90 = scmp.ne.s32.totalorder %s75, %s89
      %p91 = scmp.eq.s32.totalorder %s23, 0
      %p92 = por %p90, %p91
      %s94 = sadd.s32 %s93, 1
      %p97 = scmp.eq.s32.totalorder %s17, 1
      %p98 = scmp.ne.s32.totalorder %s93, %s95
      %p99 = scmp.eq.s32.totalorder %s17, 0
      %p100 = por %p98, %p99
      %p101 = scmp.ne.s32.totalorder %s93, %s95
      %p102 = scmp.eq.s32.totalorder %s22, 1
      %p103 = por %p101, %p102
      %p104 = scmp.ne.s32.totalorder %s95, %s96
      %p105 = scmp.eq.s32.totalorder %s22, 0
      %p106 = por %p104, %p105
      %p107 = scmp.ne.s32.totalorder %s95, %s96
      %p108 = scmp.eq.s32.totalorder %s23, 1
      %p109 = por %p107, %p108
      %p111 = scmp.ne.s32.totalorder %s96, %s110
      %p112 = scmp.eq.s32.totalorder %s23, 0
      %p113 = por %p111, %p112
      %s114 = ssub.s32 %s17, %s24
      %p115 = scmp.eq.s32.totalorder %s114, 0
      %s117 = sadd.s32 %s116, 1
      %s118 = scalar_select %p115, %s116, %s117
      %p121 = pneg %p115
      %p122 = scmp.eq.s32.totalorder %s17, 1
      %p123 = por %p121, %p122
      %p124 = scmp.ne.s32.totalorder %s116, %s119
      %p125 = scmp.eq.s32.totalorder %s17, 0
      %p126 = por %p124, %p125
      %p127 = scmp.ne.s32.totalorder %s116, %s119
      %p128 = scmp.eq.s32.totalorder %s22, 1
      %p129 = por %p127, %p128
      %p130 = scmp.ne.s32.totalorder %s119, %s120
      %p131 = scmp.eq.s32.totalorder %s22, 0
      %p132 = por %p130, %p131
      %p133 = scmp.ne.s32.totalorder %s119, %s120
      %p134 = scmp.eq.s32.totalorder %s23, 1
      %p135 = por %p133, %p134
      %p137 = scmp.ne.s32.totalorder %s120, %s136
      %p138 = scmp.eq.s32.totalorder %s23, 0
      %p139 = por %p137, %p138
      %p140 = scmp.le.s32.totalorder 1, %s17
      %p141 = scmp.lt.s32.totalorder %s17, 3
      %p142 = pnand %p140, %p141
      %p143 = pneg %p142
      // Predicated region
      $region9: #{tpu_custom_call.1} parent=5 // pred_check
        _
      $region10: #{tpu_custom_call.1} parent=5 // pred_check_branch
        %145 = sbr.rel (%p142) target = $region12
      $region11: #{tpu_custom_call.1} parent=5 // pred_region
        %s146 = ssub.s32 %s17, 1
        // Predicated region
        $region13: #{tpu_custom_call.1} parent=11 // pred_check
          %p147 = pneg %p64
        $region14: #{tpu_custom_call.1} parent=11 // pred_check_branch
          %149 = sbr.rel (%p147) target = $region16
        $region15: #{tpu_custom_call.1} parent=11 // pred_region
          %s151 = ssub.s32 512, 512
          %152 = vsyncadd [#allocation6], %s151
          %s153 = sshll.u32 [#allocation5], 4
          %s154 = int_to_ptr.vmem [resolvable:$true] %s153
          %159 = dma.hbm_to_vmem [thread:$0]  %s1, 512, %s154, [#allocation6], 128, 128, 8
        $region16: #{tpu_custom_call.1} parent=11 // pred_fallthru
          _
        // Predicated region
        $region17: #{tpu_custom_call.1} parent=11 // pred_check
          %p160 = pneg %p85
        $region18: #{tpu_custom_call.1} parent=11 // pred_check_branch
          %162 = sbr.rel (%p160) target = $region20
        $region19: #{tpu_custom_call.1} parent=11 // pred_region
          %s164 = ssub.s32 512, 512
          %165 = vsyncadd [#allocation6], %s164
          %s166 = sshll.u32 [#allocation7], 4
          %s167 = int_to_ptr.vmem [resolvable:$true] %s166
          %172 = dma.hbm_to_vmem [thread:$0]  %s2, 512, %s167, [#allocation6], 128, 128, 8
        $region20: #{tpu_custom_call.1} parent=11 // pred_fallthru
          _
        // Predicated region
        $region21: #{tpu_custom_call.1} parent=11 // pred_check
          %p173 = pneg %p106
        $region22: #{tpu_custom_call.1} parent=11 // pred_check_branch
          %175 = sbr.rel (%p173) target = $region24
        $region23: #{tpu_custom_call.1} parent=11 // pred_region
          _
        $region24: #{tpu_custom_call.1} parent=11 // pred_fallthru
          _
      $region12: #{tpu_custom_call.1} parent=5 // pred_fallthru
        _
      %p176 = scmp.lt.s32.totalorder %s17, 2
      // Predicated region
      $region25: #{tpu_custom_call.1} parent=5 // pred_check
        %p177 = pneg %p176
      $region26: #{tpu_custom_call.1} parent=5 // pred_check_branch
        %179 = sbr.rel (%p177) target = $region28
      $region27: #{tpu_custom_call.1} parent=5 // pred_region
        // Predicated region
        $region29: #{tpu_custom_call.1} parent=27 // pred_check
          %p180 = pneg %p37
        $region30: #{tpu_custom_call.1} parent=27 // pred_check_branch
          %182 = sbr.rel (%p180) target = $region32
        $region31: #{tpu_custom_call.1} parent=27 // pred_region
          %s183 = sand.u32 %s27, 1
          %s184 = scalar_lea.sflag [#allocation3], %s183
          %s185 = sand.u32 %s27, 1
          %s186 = smul.addr %s185, 8
          %s187 = scalar_lea.vmem [#allocation2], %s186
          %s189 = ssub.s32 128, 128
          %190 = vsyncadd %s184, %s189
          %s191 = smul.addr %s17, 128
          %s192 = scalar_lea.hbm %s0, %s191
          %s194 = sshll.u32 %s187, 4
          %s195 = int_to_ptr.vmem [resolvable:$true] %s194
          %197 = dma.hbm_to_vmem [thread:$0]  %s192, 128, %s195, %s184
        $region32: #{tpu_custom_call.1} parent=27 // pred_fallthru
          _
      $region28: #{tpu_custom_call.1} parent=5 // pred_fallthru
        _
      %p198 = scmp.le.s32.totalorder 1, %s17
      %p199 = scmp.lt.s32.totalorder %s17, 3
      %p200 = pnand %p198, %p199
      %p201 = pneg %p200
      // Predicated region
      $region33: #{tpu_custom_call.1} parent=5 // pred_check
        _
      $region34: #{tpu_custom_call.1} parent=5 // pred_check_branch
        %203 = sbr.rel (%p200) target = $region36
      $region35: #{tpu_custom_call.1} parent=5 // pred_region
        %s204 = ssub.s32 %s17, 1
        %s205 = sand.u32 %s30, 1
        %s206 = scalar_lea.sflag [#allocation3], %s205
        %s207 = sand.u32 %s30, 1
        %s208 = smul.addr %s207, 8
        %s209 = scalar_lea.vmem [#allocation2], %s208
        // Predicated region
        $region37: #{tpu_custom_call.1} parent=35 // pred_check
          %p210 = pneg %p43
        $region38: #{tpu_custom_call.1} parent=35 // pred_check_branch
          %212 = sbr.rel (%p210) target = $region40
        $region39: #{tpu_custom_call.1} parent=35 // pred_region
          %213 = dma.done %s206, 128
        $region40: #{tpu_custom_call.1} parent=35 // pred_fallthru
          _
        // Predicated region
        $region41: #{tpu_custom_call.1} parent=35 // pred_check
          %p214 = pneg %p64
        $region42: #{tpu_custom_call.1} parent=35 // pred_check_branch
          %216 = sbr.rel (%p214) target = $region44
        $region43: #{tpu_custom_call.1} parent=35 // pred_region
          %217 = dma.done [#allocation6], 512
        $region44: #{tpu_custom_call.1} parent=35 // pred_fallthru
          _
        // Predicated region
        $region45: #{tpu_custom_call.1} parent=35 // pred_check
          %p218 = pneg %p85
        $region46: #{tpu_custom_call.1} parent=35 // pred_check_branch
          %220 = sbr.rel (%p218) target = $region48
        $region47: #{tpu_custom_call.1} parent=35 // pred_region
          %221 = dma.done [#allocation6], 512
        $region48: #{tpu_custom_call.1} parent=35 // pred_fallthru
          _
        %s222 = sand.u32 %s30, 1
        %s223 = scalar_lea.sflag [#allocation3], %s222
        %s224 = sand.u32 %s30, 1
        %s225 = smul.addr %s224, 8
        %s226 = scalar_lea.vmem [#allocation2], %s225
        %p227 = pneg %p43
        %p228 = pneg %p40
        %p229 = pneg %p64
        %p230 = pneg %p61
        %p231 = pneg %p85
        %p232 = pneg %p82
        %p233 = pneg %p106
        %p234 = pneg %p103
        %p235 = pneg %p132
        %p236 = pneg %p129
        %s237 = sand.u32 %s119, 1
        %s238 = scalar_lea.sflag [#allocation4], %s237
        %s239 = sand.u32 %s119, 1
        %s240 = smul.addr %s239, 8
        %s241 = scalar_lea.vmem [#allocation8], %s240
        %v242 = vld [vmem:[%s209] sm:$0xff]
        %v243 = vld [vmem:[#allocation5] sm:$0xff]
        %v244 = vld [vmem:[#allocation5 + $0x8] sm:$0xff]
        %v245 = vld [vmem:[#allocation5 + $0x10] sm:$0xff]
        %v246 = vld [vmem:[#allocation5 + $0x18] sm:$0xff]
        %vm247 = vcmask 261120
        %v249 = vsel %vm247, %v242, 0
        %251 = vmatprep.subr.mxu0 0.0
        %252 = vmatpush1.msra.mxu0 0.0
        %253 = vmatprep.subr.mxu0 0.0
        %254 = vmatpush1.msra.mxu0 0.0
        %255 = vmatprep.subr.mxu0 0.0
        %256 = vmatpush1.msra.mxu0 0.0
        %257 = vmatprep.subr.mxu0 0.0
        %258 = vmatpush1.msra.mxu0 0.0
        %259 = vmatprep.subr.mxu0 0.0
        %260 = vmatpush1.msra.mxu0 0.0
        %261 = vmatprep.subr.mxu0 0.0
        %262 = vmatpush1.msra.mxu0 0.0
        %263 = vmatprep.subr.mxu0 0.0
        %264 = vmatpush1.msra.mxu0 0.0
        %265 = vmatprep.subr.mxu0 0.0
        %266 = vmatpush1.msra.mxu0 0.0
        %267 = vmatprep.subr.mxu0 0.0
        %268 = vmatpush1.msra.mxu0 0.0
        %269 = vmatprep.subr.mxu0 0.0
        %270 = vmatpush1.msra.mxu0 0.0
        %271 = vmatprep.subr.mxu0 0.0
        %272 = vmatpush1.msra.mxu0 0.0
        %273 = vmatprep.subr.mxu0 0.0
        %274 = vmatpush1.msra.mxu0 0.0
        %275 = vmatprep.subr.mxu0 0.0
        %276 = vmatpush1.msra.mxu0 %v246
        %277 = vmatprep.subr.mxu0 0.0
        %278 = vmatpush1.msra.mxu0 %v245
        %279 = vmatprep.subr.mxu0 0.0
        %280 = vmatpush1.msra.mxu0 %v244
        %281 = vmatprep.subr.mxu0 0.0
        %282 = vmatpush1.msra.mxu0 %v243
        %283 = vmatprep.subr.mxu0 0.0
        %284 = vmatpush2.msra.mxu0 0.0
        %285 = vmatprep.subr.mxu0 0.0
        %286 = vmatpush2.msra.mxu0 0.0
        %287 = vmatprep.subr.mxu0 0.0
        %288 = vmatpush2.msra.mxu0 0.0
        %289 = vmatprep.subr.mxu0 0.0
        %290 = vmatpush2.msra.mxu0 0.0
        %291 = vmatprep.subr.mxu0 0.0
        %292 = vmatpush2.msra.mxu0 0.0
        %293 = vmatprep.subr.mxu0 0.0
        %294 = vmatpush2.msra.mxu0 0.0
        %295 = vmatprep.subr.mxu0 0.0
        %296 = vmatpush2.msra.mxu0 0.0
        %297 = vmatprep.subr.mxu0 0.0
        %298 = vmatpush2.msra.mxu0 0.0
        %299 = vmatprep.subr.mxu0 0.0
        %300 = vmatpush2.msra.mxu0 0.0
        %301 = vmatprep.subr.mxu0 0.0
        %302 = vmatpush2.msra.mxu0 0.0
        %303 = vmatprep.subr.mxu0 0.0
        %304 = vmatpush2.msra.mxu0 0.0
        %305 = vmatprep.subr.mxu0 0.0
        %306 = vmatpush2.msra.mxu0 0.0
        %307 = vmatprep.subr.mxu0 0.0
        %308 = vmatpush2.msra.mxu0 0.0
        %309 = vmatprep.subr.mxu0 0.0
        %310 = vmatpush2.msra.mxu0 0.0
        %311 = vmatprep.subr.mxu0 0.0
        %312 = vmatpush2.msra.mxu0 0.0
        %313 = vmatprep.subr.mxu0 0.0
        %314 = vmatpush2.msra.mxu0 0.0
        %315 = vmatprep.mubr.f32.mxu0 0.0
        %316 = vmatmul.mubr.f32.gmra.mxu0 %v249
        %v317 = vpop.f32.mrf.mxu0
        %v318 = vadd.f32 0.0, %v317
        %v319 = vpop.f32.mrf.mxu0
        %320 = vdwg.mxu0
        %v321 = vlaneseq
        %v322 = vshrl.u32 %v321, 7
        %v323 = vlaneseq
        %v324 = vand.u32 %v323, 127
        %vm325 = vcmp.le.s32.totalorder %v324, %v322
        %v326 = vsel %vm325, 0.0, -1e+30
        %v327 = vld [vmem:[#allocation7] sm:$0xff]
        %v328 = vld [vmem:[#allocation7 + $0x8] sm:$0xff]
        %v329 = vld [vmem:[#allocation7 + $0x10] sm:$0xff]
        %v330 = vld [vmem:[#allocation7 + $0x18] sm:$0xff]
        %332 = vrot.lane.b32.xlu0 %v318, 96
        %v333 = vpop.permute.xlu0 %332
        %vm334 = vcmask 64512
        %v335 = vsel %vm334, %v318, 0
        %v337 = vsel %vm334, %v333, 0
        %339 = vmatprep.subr.mxu0 0.0
        %340 = vmatpush1.xpose.msra.mxu0 0.0
        %341 = vmatprep.subr.mxu0 0.0
        %342 = vmatpush1.xpose.msra.mxu0 0.0
        %343 = vmatprep.subr.mxu0 0.0
        %344 = vmatpush1.xpose.msra.mxu0 0.0
        %345 = vmatprep.subr.mxu0 0.0
        %346 = vmatpush1.xpose.msra.mxu0 0.0
        %347 = vmatprep.subr.mxu0 0.0
        %348 = vmatpush1.xpose.msra.mxu0 0.0
        %349 = vmatprep.subr.mxu0 0.0
        %350 = vmatpush1.xpose.msra.mxu0 0.0
        %351 = vmatprep.subr.mxu0 0.0
        %352 = vmatpush1.xpose.msra.mxu0 0.0
        %353 = vmatprep.subr.mxu0 0.0
        %354 = vmatpush1.xpose.msra.mxu0 0.0
        %355 = vmatprep.subr.mxu0 0.0
        %356 = vmatpush1.xpose.msra.mxu0 0.0
        %357 = vmatprep.subr.mxu0 0.0
        %358 = vmatpush1.xpose.msra.mxu0 0.0
        %359 = vmatprep.subr.mxu0 0.0
        %360 = vmatpush1.xpose.msra.mxu0 0.0
        %361 = vmatprep.subr.mxu0 0.0
        %362 = vmatpush1.xpose.msra.mxu0 0.0
        %363 = vmatprep.subr.mxu0 0.0
        %364 = vmatpush1.xpose.msra.mxu0 0.0
        %365 = vmatprep.subr.mxu0 0.0
        %366 = vmatpush1.xpose.msra.mxu0 0.0
        %367 = vmatprep.subr.mxu0 0.0
        %368 = vmatpush1.xpose.msra.mxu0 0.0
        %369 = vmatprep.subr.mxu0 0.0
        %370 = vmatpush1.xpose.msra.mxu0 %v337
        %371 = vmatprep.subr.mxu0 0.0
        %372 = vmatpush2.xpose.msra.mxu0 0.0
        %373 = vmatprep.subr.mxu0 0.0
        %374 = vmatpush2.xpose.msra.mxu0 0.0
        %375 = vmatprep.subr.mxu0 0.0
        %376 = vmatpush2.xpose.msra.mxu0 0.0
        %377 = vmatprep.subr.mxu0 0.0
        %378 = vmatpush2.xpose.msra.mxu0 0.0
        %379 = vmatprep.subr.mxu0 0.0
        %380 = vmatpush2.xpose.msra.mxu0 0.0
        %381 = vmatprep.subr.mxu0 0.0
        %382 = vmatpush2.xpose.msra.mxu0 0.0
        %383 = vmatprep.subr.mxu0 0.0
        %384 = vmatpush2.xpose.msra.mxu0 0.0
        %385 = vmatprep.subr.mxu0 0.0
        %386 = vmatpush2.xpose.msra.mxu0 0.0
        %387 = vmatprep.subr.mxu0 0.0
        %388 = vmatpush2.xpose.msra.mxu0 0.0
        %389 = vmatprep.subr.mxu0 0.0
        %390 = vmatpush2.xpose.msra.mxu0 0.0
        %391 = vmatprep.subr.mxu0 0.0
        %392 = vmatpush2.xpose.msra.mxu0 0.0
        %393 = vmatprep.subr.mxu0 0.0
        %394 = vmatpush2.xpose.msra.mxu0 0.0
        %395 = vmatprep.subr.mxu0 0.0
        %396 = vmatpush2.xpose.msra.mxu0 0.0
        %397 = vmatprep.subr.mxu0 0.0
        %398 = vmatpush2.xpose.msra.mxu0 0.0
        %399 = vmatprep.subr.mxu0 0.0
        %400 = vmatpush2.xpose.msra.mxu0 0.0
        %401 = vmatprep.subr.mxu0 0.0
        %402 = vmatpush2.xpose.msra.mxu0 0.0
        %403 = vmatprep.mubr.f32.mxu0 0.0
        %404 = vmatmul.mubr.f32.gmra.mxu0 %v335
        %v405 = vpop.f32.mrf.mxu0
        %v406 = vadd.f32 0.0, %v405
        %v407 = vpop.f32.mrf.mxu0
        %408 = vdwg.mxu0
        %v409 = vmul.f32 %v406, 0.17677669
        %v410 = vadd.f32 %v409, %v326
        %v411 = vsel %vm334, %v410, -inf
        %412 = vmax.xlane.f32.xlu0 %v411
        %v413 = vpop.xlane.xlu0 %412
        %v414 = vsub.f32 %v410, %v413
        %v415 = vmul.f32 %v414, 1.442695
        %v416 = vpow.pop %v415
        %v417 = vsel %vm334, %v416, 0.0
        %418 = vadd.xlane.f32.xlu0 %v417
        %v419 = vpop.xlane.xlu0 %418
        %v420 = vrcp.pop %v419
        %v421 = vmul.f32 %v416, %v420
        %422 = vrot.lane.b32.xlu0 %v318, 64
        %v423 = vpop.permute.xlu0 %422
        %v426 = vsel %vm334, %v421, 0
        %428 = vmatprep.subr.mxu0 0.0
        %429 = vmatpush1.msra.mxu0 0.0
        %430 = vmatprep.subr.mxu0 0.0
        %431 = vmatpush1.msra.mxu0 0.0
        %432 = vmatprep.subr.mxu0 0.0
        %433 = vmatpush1.msra.mxu0 0.0
        %434 = vmatprep.subr.mxu0 0.0
        %435 = vmatpush1.msra.mxu0 0.0
        %436 = vmatprep.subr.mxu0 0.0
        %437 = vmatpush1.msra.mxu0 0.0
        %438 = vmatprep.subr.mxu0 0.0
        %439 = vmatpush1.msra.mxu0 0.0
        %440 = vmatprep.subr.mxu0 0.0
        %441 = vmatpush1.msra.mxu0 0.0
        %442 = vmatprep.subr.mxu0 0.0
        %443 = vmatpush1.msra.mxu0 0.0
        %444 = vmatprep.subr.mxu0 0.0
        %445 = vmatpush1.msra.mxu0 0.0
        %446 = vmatprep.subr.mxu0 0.0
        %447 = vmatpush1.msra.mxu0 0.0
        %448 = vmatprep.subr.mxu0 0.0
        %449 = vmatpush1.msra.mxu0 0.0
        %450 = vmatprep.subr.mxu0 0.0
        %451 = vmatpush1.msra.mxu0 0.0
        %452 = vmatprep.subr.mxu0 0.0
        %453 = vmatpush1.msra.mxu0 0.0
        %454 = vmatprep.subr.mxu0 0.0
        %455 = vmatpush1.msra.mxu0 0.0
        %456 = vmatprep.subr.mxu0 0.0
        %457 = vmatpush1.msra.mxu0 0.0
        %458 = vmatprep.subr.mxu0 0.0
        %459 = vmatpush1.msra.mxu0 %v423
        %460 = vmatprep.subr.mxu0 0.0
        %461 = vmatpush2.msra.mxu0 0.0
        %462 = vmatprep.subr.mxu0 0.0
        %463 = vmatpush2.msra.mxu0 0.0
        %464 = vmatprep.subr.mxu0 0.0
        %465 = vmatpush2.msra.mxu0 0.0
        %466 = vmatprep.subr.mxu0 0.0
        %467 = vmatpush2.msra.mxu0 0.0
        %468 = vmatprep.subr.mxu0 0.0
        %469 = vmatpush2.msra.mxu0 0.0
        %470 = vmatprep.subr.mxu0 0.0
        %471 = vmatpush2.msra.mxu0 0.0
        %472 = vmatprep.subr.mxu0 0.0
        %473 = vmatpush2.msra.mxu0 0.0
        %474 = vmatprep.subr.mxu0 0.0
        %475 = vmatpush2.msra.mxu0 0.0
        %476 = vmatprep.subr.mxu0 0.0
        %477 = vmatpush2.msra.mxu0 0.0
        %478 = vmatprep.subr.mxu0 0.0
        %479 = vmatpush2.msra.mxu0 0.0
        %480 = vmatprep.subr.mxu0 0.0
        %481 = vmatpush2.msra.mxu0 0.0
        %482 = vmatprep.subr.mxu0 0.0
        %483 = vmatpush2.msra.mxu0 0.0
        %484 = vmatprep.subr.mxu0 0.0
        %485 = vmatpush2.msra.mxu0 0.0
        %486 = vmatprep.subr.mxu0 0.0
        %487 = vmatpush2.msra.mxu0 0.0
        %488 = vmatprep.subr.mxu0 0.0
        %489 = vmatpush2.msra.mxu0 0.0
        %490 = vmatprep.subr.mxu0 0.0
        %491 = vmatpush2.msra.mxu0 0.0
        %492 = vmatprep.mubr.f32.mxu0 0.0
        %493 = vmatmul.mubr.f32.gmra.mxu0 %v426
        %v494 = vpop.f32.mrf.mxu0
        %v495 = vadd.f32 0.0, %v494
        %v496 = vpop.f32.mrf.mxu0
        %497 = vdwg.mxu0
        %498 = vrot.lane.b32.xlu0 %v318, 120
        %v499 = vpop.permute.xlu0 %498
        %500 = vrot.lane.b32.xlu0 %v318, 88
        %v501 = vpop.permute.xlu0 %500
        %v502 = vsel %vm334, %v499, 0
        %v504 = vsel %vm334, %v501, 0
        %506 = vmatprep.subr.mxu0 0.0
        %507 = vmatpush1.xpose.msra.mxu0 0.0
        %508 = vmatprep.subr.mxu0 0.0
        %509 = vmatpush1.xpose.msra.mxu0 0.0
        %510 = vmatprep.subr.mxu0 0.0
        %511 = vmatpush1.xpose.msra.mxu0 0.0
        %512 = vmatprep.subr.mxu0 0.0
        %513 = vmatpush1.xpose.msra.mxu0 0.0
        %514 = vmatprep.subr.mxu0 0.0
        %515 = vmatpush1.xpose.msra.mxu0 0.0
        %516 = vmatprep.subr.mxu0 0.0
        %517 = vmatpush1.xpose.msra.mxu0 0.0
        %518 = vmatprep.subr.mxu0 0.0
        %519 = vmatpush1.xpose.msra.mxu0 0.0
        %520 = vmatprep.subr.mxu0 0.0
        %521 = vmatpush1.xpose.msra.mxu0 0.0
        %522 = vmatprep.subr.mxu0 0.0
        %523 = vmatpush1.xpose.msra.mxu0 0.0
        %524 = vmatprep.subr.mxu0 0.0
        %525 = vmatpush1.xpose.msra.mxu0 0.0
        %526 = vmatprep.subr.mxu0 0.0
        %527 = vmatpush1.xpose.msra.mxu0 0.0
        %528 = vmatprep.subr.mxu0 0.0
        %529 = vmatpush1.xpose.msra.mxu0 0.0
        %530 = vmatprep.subr.mxu0 0.0
        %531 = vmatpush1.xpose.msra.mxu0 0.0
        %532 = vmatprep.subr.mxu0 0.0
        %533 = vmatpush1.xpose.msra.mxu0 0.0
        %534 = vmatprep.subr.mxu0 0.0
        %535 = vmatpush1.xpose.msra.mxu0 0.0
        %536 = vmatprep.subr.mxu0 0.0
        %537 = vmatpush1.xpose.msra.mxu0 %v504
        %538 = vmatprep.subr.mxu0 0.0
        %539 = vmatpush2.xpose.msra.mxu0 0.0
        %540 = vmatprep.subr.mxu0 0.0
        %541 = vmatpush2.xpose.msra.mxu0 0.0
        %542 = vmatprep.subr.mxu0 0.0
        %543 = vmatpush2.xpose.msra.mxu0 0.0
        %544 = vmatprep.subr.mxu0 0.0
        %545 = vmatpush2.xpose.msra.mxu0 0.0
        %546 = vmatprep.subr.mxu0 0.0
        %547 = vmatpush2.xpose.msra.mxu0 0.0
        %548 = vmatprep.subr.mxu0 0.0
        %549 = vmatpush2.xpose.msra.mxu0 0.0
        %550 = vmatprep.subr.mxu0 0.0
        %551 = vmatpush2.xpose.msra.mxu0 0.0
        %552 = vmatprep.subr.mxu0 0.0
        %553 = vmatpush2.xpose.msra.mxu0 0.0
        %554 = vmatprep.subr.mxu0 0.0
        %555 = vmatpush2.xpose.msra.mxu0 0.0
        %556 = vmatprep.subr.mxu0 0.0
        %557 = vmatpush2.xpose.msra.mxu0 0.0
        %558 = vmatprep.subr.mxu0 0.0
        %559 = vmatpush2.xpose.msra.mxu0 0.0
        %560 = vmatprep.subr.mxu0 0.0
        %561 = vmatpush2.xpose.msra.mxu0 0.0
        %562 = vmatprep.subr.mxu0 0.0
        %563 = vmatpush2.xpose.msra.mxu0 0.0
        %564 = vmatprep.subr.mxu0 0.0
        %565 = vmatpush2.xpose.msra.mxu0 0.0
        %566 = vmatprep.subr.mxu0 0.0
        %567 = vmatpush2.xpose.msra.mxu0 0.0
        %568 = vmatprep.subr.mxu0 0.0
        %569 = vmatpush2.xpose.msra.mxu0 0.0
        %570 = vmatprep.mubr.f32.mxu0 0.0
        %571 = vmatmul.mubr.f32.gmra.mxu0 %v502
        %v572 = vpop.f32.mrf.mxu0
        %v573 = vadd.f32 0.0, %v572
        %v574 = vpop.f32.mrf.mxu0
        %575 = vdwg.mxu0
        %v576 = vmul.f32 %v573, 0.17677669
        %v577 = vadd.f32 %v576, %v326
        %v578 = vsel %vm334, %v577, -inf
        %579 = vmax.xlane.f32.xlu0 %v578
        %v580 = vpop.xlane.xlu0 %579
        %v581 = vsub.f32 %v577, %v580
        %v582 = vmul.f32 %v581, 1.442695
        %v583 = vpow.pop %v582
        %v584 = vsel %vm334, %v583, 0.0
        %585 = vadd.xlane.f32.xlu0 %v584
        %v586 = vpop.xlane.xlu0 %585
        %v587 = vrcp.pop %v586
        %v588 = vmul.f32 %v583, %v587
        %589 = vrot.lane.b32.xlu0 %v318, 56
        %v590 = vpop.permute.xlu0 %589
        %v593 = vsel %vm334, %v588, 0
        %595 = vmatprep.subr.mxu0 0.0
        %596 = vmatpush1.msra.mxu0 0.0
        %597 = vmatprep.subr.mxu0 0.0
        %598 = vmatpush1.msra.mxu0 0.0
        %599 = vmatprep.subr.mxu0 0.0
        %600 = vmatpush1.msra.mxu0 0.0
        %601 = vmatprep.subr.mxu0 0.0
        %602 = vmatpush1.msra.mxu0 0.0
        %603 = vmatprep.subr.mxu0 0.0
        %604 = vmatpush1.msra.mxu0 0.0
        %605 = vmatprep.subr.mxu0 0.0
        %606 = vmatpush1.msra.mxu0 0.0
        %607 = vmatprep.subr.mxu0 0.0
        %608 = vmatpush1.msra.mxu0 0.0
        %609 = vmatprep.subr.mxu0 0.0
        %610 = vmatpush1.msra.mxu0 0.0
        %611 = vmatprep.subr.mxu0 0.0
        %612 = vmatpush1.msra.mxu0 0.0
        %613 = vmatprep.subr.mxu0 0.0
        %614 = vmatpush1.msra.mxu0 0.0
        %615 = vmatprep.subr.mxu0 0.0
        %616 = vmatpush1.msra.mxu0 0.0
        %617 = vmatprep.subr.mxu0 0.0
        %618 = vmatpush1.msra.mxu0 0.0
        %619 = vmatprep.subr.mxu0 0.0
        %620 = vmatpush1.msra.mxu0 0.0
        %621 = vmatprep.subr.mxu0 0.0
        %622 = vmatpush1.msra.mxu0 0.0
        %623 = vmatprep.subr.mxu0 0.0
        %624 = vmatpush1.msra.mxu0 0.0
        %625 = vmatprep.subr.mxu0 0.0
        %626 = vmatpush1.msra.mxu0 %v590
        %627 = vmatprep.subr.mxu0 0.0
        %628 = vmatpush2.msra.mxu0 0.0
        %629 = vmatprep.subr.mxu0 0.0
        %630 = vmatpush2.msra.mxu0 0.0
        %631 = vmatprep.subr.mxu0 0.0
        %632 = vmatpush2.msra.mxu0 0.0
        %633 = vmatprep.subr.mxu0 0.0
        %634 = vmatpush2.msra.mxu0 0.0
        %635 = vmatprep.subr.mxu0 0.0
        %636 = vmatpush2.msra.mxu0 0.0
        %637 = vmatprep.subr.mxu0 0.0
        %638 = vmatpush2.msra.mxu0 0.0
        %639 = vmatprep.subr.mxu0 0.0
        %640 = vmatpush2.msra.mxu0 0.0
        %641 = vmatprep.subr.mxu0 0.0
        %642 = vmatpush2.msra.mxu0 0.0
        %643 = vmatprep.subr.mxu0 0.0
        %644 = vmatpush2.msra.mxu0 0.0
        %645 = vmatprep.subr.mxu0 0.0
        %646 = vmatpush2.msra.mxu0 0.0
        %647 = vmatprep.subr.mxu0 0.0
        %648 = vmatpush2.msra.mxu0 0.0
        %649 = vmatprep.subr.mxu0 0.0
        %650 = vmatpush2.msra.mxu0 0.0
        %651 = vmatprep.subr.mxu0 0.0
        %652 = vmatpush2.msra.mxu0 0.0
        %653 = vmatprep.subr.mxu0 0.0
        %654 = vmatpush2.msra.mxu0 0.0
        %655 = vmatprep.subr.mxu0 0.0
        %656 = vmatpush2.msra.mxu0 0.0
        %657 = vmatprep.subr.mxu0 0.0
        %658 = vmatpush2.msra.mxu0 0.0
        %659 = vmatprep.mubr.f32.mxu0 0.0
        %660 = vmatmul.mubr.f32.gmra.mxu0 %v593
        %v661 = vpop.f32.mrf.mxu0
        %v662 = vadd.f32 0.0, %v661
        %v663 = vpop.f32.mrf.mxu0
        %664 = vdwg.mxu0
        %v666 = vsel %vm334, %v662, 0
        %668 = vmatprep.subr.mxu0 0.0
        %669 = vmatpush1.msra.mxu0 0.0
        %670 = vmatprep.subr.mxu0 0.0
        %671 = vmatpush1.msra.mxu0 0.0
        %672 = vmatprep.subr.mxu0 0.0
        %673 = vmatpush1.msra.mxu0 0.0
        %674 = vmatprep.subr.mxu0 0.0
        %675 = vmatpush1.msra.mxu0 0.0
        %676 = vmatprep.subr.mxu0 0.0
        %677 = vmatpush1.msra.mxu0 0.0
        %678 = vmatprep.subr.mxu0 0.0
        %679 = vmatpush1.msra.mxu0 0.0
        %680 = vmatprep.subr.mxu0 0.0
        %681 = vmatpush1.msra.mxu0 0.0
        %682 = vmatprep.subr.mxu0 0.0
        %683 = vmatpush1.msra.mxu0 0.0
        %684 = vmatprep.subr.mxu0 0.0
        %685 = vmatpush1.msra.mxu0 0.0
        %686 = vmatprep.subr.mxu0 0.0
        %687 = vmatpush1.msra.mxu0 0.0
        %688 = vmatprep.subr.mxu0 0.0
        %689 = vmatpush1.msra.mxu0 0.0
        %690 = vmatprep.subr.mxu0 0.0
        %691 = vmatpush1.msra.mxu0 0.0
        %692 = vmatprep.subr.mxu0 0.0
        %693 = vmatpush1.msra.mxu0 0.0
        %694 = vmatprep.subr.mxu0 0.0
        %695 = vmatpush1.msra.mxu0 0.0
        %696 = vmatprep.subr.mxu0 0.0
        %697 = vmatpush1.msra.mxu0 0.0
        %698 = vmatprep.subr.mxu0 0.0
        %699 = vmatpush1.msra.mxu0 %v328
        %700 = vmatprep.subr.mxu0 0.0
        %701 = vmatpush2.msra.mxu0 0.0
        %702 = vmatprep.subr.mxu0 0.0
        %703 = vmatpush2.msra.mxu0 0.0
        %704 = vmatprep.subr.mxu0 0.0
        %705 = vmatpush2.msra.mxu0 0.0
        %706 = vmatprep.subr.mxu0 0.0
        %707 = vmatpush2.msra.mxu0 0.0
        %708 = vmatprep.subr.mxu0 0.0
        %709 = vmatpush2.msra.mxu0 0.0
        %710 = vmatprep.subr.mxu0 0.0
        %711 = vmatpush2.msra.mxu0 0.0
        %712 = vmatprep.subr.mxu0 0.0
        %713 = vmatpush2.msra.mxu0 0.0
        %714 = vmatprep.subr.mxu0 0.0
        %715 = vmatpush2.msra.mxu0 0.0
        %716 = vmatprep.subr.mxu0 0.0
        %717 = vmatpush2.msra.mxu0 0.0
        %718 = vmatprep.subr.mxu0 0.0
        %719 = vmatpush2.msra.mxu0 0.0
        %720 = vmatprep.subr.mxu0 0.0
        %721 = vmatpush2.msra.mxu0 0.0
        %722 = vmatprep.subr.mxu0 0.0
        %723 = vmatpush2.msra.mxu0 0.0
        %724 = vmatprep.subr.mxu0 0.0
        %725 = vmatpush2.msra.mxu0 0.0
        %726 = vmatprep.subr.mxu0 0.0
        %727 = vmatpush2.msra.mxu0 0.0
        %728 = vmatprep.subr.mxu0 0.0
        %729 = vmatpush2.msra.mxu0 0.0
        %730 = vmatprep.subr.mxu0 0.0
        %731 = vmatpush2.msra.mxu0 0.0
        %732 = vmatprep.mubr.f32.mxu0 0.0
        %733 = vmatmul.mubr.f32.gmra.mxu0 %v666
        %v734 = vpop.f32.mrf.mxu0
        %v735 = vadd.f32 0.0, %v734
        %v736 = vpop.f32.mrf.mxu0
        %737 = vdwg.mxu0
        %v739 = vsel %vm334, %v495, 0
        %741 = vmatprep.subr.mxu0 0.0
        %742 = vmatpush1.msra.mxu0 0.0
        %743 = vmatprep.subr.mxu0 0.0
        %744 = vmatpush1.msra.mxu0 0.0
        %745 = vmatprep.subr.mxu0 0.0
        %746 = vmatpush1.msra.mxu0 0.0
        %747 = vmatprep.subr.mxu0 0.0
        %748 = vmatpush1.msra.mxu0 0.0
        %749 = vmatprep.subr.mxu0 0.0
        %750 = vmatpush1.msra.mxu0 0.0
        %751 = vmatprep.subr.mxu0 0.0
        %752 = vmatpush1.msra.mxu0 0.0
        %753 = vmatprep.subr.mxu0 0.0
        %754 = vmatpush1.msra.mxu0 0.0
        %755 = vmatprep.subr.mxu0 0.0
        %756 = vmatpush1.msra.mxu0 0.0
        %757 = vmatprep.subr.mxu0 0.0
        %758 = vmatpush1.msra.mxu0 0.0
        %759 = vmatprep.subr.mxu0 0.0
        %760 = vmatpush1.msra.mxu0 0.0
        %761 = vmatprep.subr.mxu0 0.0
        %762 = vmatpush1.msra.mxu0 0.0
        %763 = vmatprep.subr.mxu0 0.0
        %764 = vmatpush1.msra.mxu0 0.0
        %765 = vmatprep.subr.mxu0 0.0
        %766 = vmatpush1.msra.mxu0 0.0
        %767 = vmatprep.subr.mxu0 0.0
        %768 = vmatpush1.msra.mxu0 0.0
        %769 = vmatprep.subr.mxu0 0.0
        %770 = vmatpush1.msra.mxu0 0.0
        %771 = vmatprep.subr.mxu0 0.0
        %772 = vmatpush1.msra.mxu0 %v327
        %773 = vmatprep.subr.mxu0 0.0
        %774 = vmatpush2.msra.mxu0 0.0
        %775 = vmatprep.subr.mxu0 0.0
        %776 = vmatpush2.msra.mxu0 0.0
        %777 = vmatprep.subr.mxu0 0.0
        %778 = vmatpush2.msra.mxu0 0.0
        %779 = vmatprep.subr.mxu0 0.0
        %780 = vmatpush2.msra.mxu0 0.0
        %781 = vmatprep.subr.mxu0 0.0
        %782 = vmatpush2.msra.mxu0 0.0
        %783 = vmatprep.subr.mxu0 0.0
        %784 = vmatpush2.msra.mxu0 0.0
        %785 = vmatprep.subr.mxu0 0.0
        %786 = vmatpush2.msra.mxu0 0.0
        %787 = vmatprep.subr.mxu0 0.0
        %788 = vmatpush2.msra.mxu0 0.0
        %789 = vmatprep.subr.mxu0 0.0
        %790 = vmatpush2.msra.mxu0 0.0
        %791 = vmatprep.subr.mxu0 0.0
        %792 = vmatpush2.msra.mxu0 0.0
        %793 = vmatprep.subr.mxu0 0.0
        %794 = vmatpush2.msra.mxu0 0.0
        %795 = vmatprep.subr.mxu0 0.0
        %796 = vmatpush2.msra.mxu0 0.0
        %797 = vmatprep.subr.mxu0 0.0
        %798 = vmatpush2.msra.mxu0 0.0
        %799 = vmatprep.subr.mxu0 0.0
        %800 = vmatpush2.msra.mxu0 0.0
        %801 = vmatprep.subr.mxu0 0.0
        %802 = vmatpush2.msra.mxu0 0.0
        %803 = vmatprep.subr.mxu0 0.0
        %804 = vmatpush2.msra.mxu0 0.0
        %805 = vmatprep.mubr.f32.mxu0 0.0
        %806 = vmatmul.mubr.f32.gmra.mxu0 %v739
        %v807 = vpop.f32.mrf.mxu0
        %v808 = vadd.f32 %v735, %v807
        %v809 = vpop.f32.mrf.mxu0
        %810 = vdwg.mxu0
        %811 = vrot.lane.b32.xlu0 %v318, 112
        %v812 = vpop.permute.xlu0 %811
        %813 = vrot.lane.b32.xlu0 %v318, 80
        %v814 = vpop.permute.xlu0 %813
        %v815 = vsel %vm334, %v812, 0
        %v817 = vsel %vm334, %v814, 0
        %819 = vmatprep.subr.mxu0 0.0
        %820 = vmatpush1.xpose.msra.mxu0 0.0
        %821 = vmatprep.subr.mxu0 0.0
        %822 = vmatpush1.xpose.msra.mxu0 0.0
        %823 = vmatprep.subr.mxu0 0.0
        %824 = vmatpush1.xpose.msra.mxu0 0.0
        %825 = vmatprep.subr.mxu0 0.0
        %826 = vmatpush1.xpose.msra.mxu0 0.0
        %827 = vmatprep.subr.mxu0 0.0
        %828 = vmatpush1.xpose.msra.mxu0 0.0
        %829 = vmatprep.subr.mxu0 0.0
        %830 = vmatpush1.xpose.msra.mxu0 0.0
        %831 = vmatprep.subr.mxu0 0.0
        %832 = vmatpush1.xpose.msra.mxu0 0.0
        %833 = vmatprep.subr.mxu0 0.0
        %834 = vmatpush1.xpose.msra.mxu0 0.0
        %835 = vmatprep.subr.mxu0 0.0
        %836 = vmatpush1.xpose.msra.mxu0 0.0
        %837 = vmatprep.subr.mxu0 0.0
        %838 = vmatpush1.xpose.msra.mxu0 0.0
        %839 = vmatprep.subr.mxu0 0.0
        %840 = vmatpush1.xpose.msra.mxu0 0.0
        %841 = vmatprep.subr.mxu0 0.0
        %842 = vmatpush1.xpose.msra.mxu0 0.0
        %843 = vmatprep.subr.mxu0 0.0
        %844 = vmatpush1.xpose.msra.mxu0 0.0
        %845 = vmatprep.subr.mxu0 0.0
        %846 = vmatpush1.xpose.msra.mxu0 0.0
        %847 = vmatprep.subr.mxu0 0.0
        %848 = vmatpush1.xpose.msra.mxu0 0.0
        %849 = vmatprep.subr.mxu0 0.0
        %850 = vmatpush1.xpose.msra.mxu0 %v817
        %851 = vmatprep.subr.mxu0 0.0
        %852 = vmatpush2.xpose.msra.mxu0 0.0
        %853 = vmatprep.subr.mxu0 0.0
        %854 = vmatpush2.xpose.msra.mxu0 0.0
        %855 = vmatprep.subr.mxu0 0.0
        %856 = vmatpush2.xpose.msra.mxu0 0.0
        %857 = vmatprep.subr.mxu0 0.0
        %858 = vmatpush2.xpose.msra.mxu0 0.0
        %859 = vmatprep.subr.mxu0 0.0
        %860 = vmatpush2.xpose.msra.mxu0 0.0
        %861 = vmatprep.subr.mxu0 0.0
        %862 = vmatpush2.xpose.msra.mxu0 0.0
        %863 = vmatprep.subr.mxu0 0.0
        %864 = vmatpush2.xpose.msra.mxu0 0.0
        %865 = vmatprep.subr.mxu0 0.0
        %866 = vmatpush2.xpose.msra.mxu0 0.0
        %867 = vmatprep.subr.mxu0 0.0
        %868 = vmatpush2.xpose.msra.mxu0 0.0
        %869 = vmatprep.subr.mxu0 0.0
        %870 = vmatpush2.xpose.msra.mxu0 0.0
        %871 = vmatprep.subr.mxu0 0.0
        %872 = vmatpush2.xpose.msra.mxu0 0.0
        %873 = vmatprep.subr.mxu0 0.0
        %874 = vmatpush2.xpose.msra.mxu0 0.0
        %875 = vmatprep.subr.mxu0 0.0
        %876 = vmatpush2.xpose.msra.mxu0 0.0
        %877 = vmatprep.subr.mxu0 0.0
        %878 = vmatpush2.xpose.msra.mxu0 0.0
        %879 = vmatprep.subr.mxu0 0.0
        %880 = vmatpush2.xpose.msra.mxu0 0.0
        %881 = vmatprep.subr.mxu0 0.0
        %882 = vmatpush2.xpose.msra.mxu0 0.0
        %883 = vmatprep.mubr.f32.mxu0 0.0
        %884 = vmatmul.mubr.f32.gmra.mxu0 %v815
        %v885 = vpop.f32.mrf.mxu0
        %v886 = vadd.f32 0.0, %v885
        %v887 = vpop.f32.mrf.mxu0
        %888 = vdwg.mxu0
        %v889 = vmul.f32 %v886, 0.17677669
        %v890 = vadd.f32 %v889, %v326
        %v891 = vsel %vm334, %v890, -inf
        %892 = vmax.xlane.f32.xlu0 %v891
        %v893 = vpop.xlane.xlu0 %892
        %v894 = vsub.f32 %v890, %v893
        %v895 = vmul.f32 %v894, 1.442695
        %v896 = vpow.pop %v895
        %v897 = vsel %vm334, %v896, 0.0
        %898 = vadd.xlane.f32.xlu0 %v897
        %v899 = vpop.xlane.xlu0 %898
        %v900 = vrcp.pop %v899
        %v901 = vmul.f32 %v896, %v900
        %902 = vrot.lane.b32.xlu0 %v318, 48
        %v903 = vpop.permute.xlu0 %902
        %v906 = vsel %vm334, %v901, 0
        %908 = vmatprep.subr.mxu0 0.0
        %909 = vmatpush1.msra.mxu0 0.0
        %910 = vmatprep.subr.mxu0 0.0
        %911 = vmatpush1.msra.mxu0 0.0
        %912 = vmatprep.subr.mxu0 0.0
        %913 = vmatpush1.msra.mxu0 0.0
        %914 = vmatprep.subr.mxu0 0.0
        %915 = vmatpush1.msra.mxu0 0.0
        %916 = vmatprep.subr.mxu0 0.0
        %917 = vmatpush1.msra.mxu0 0.0
        %918 = vmatprep.subr.mxu0 0.0
        %919 = vmatpush1.msra.mxu0 0.0
        %920 = vmatprep.subr.mxu0 0.0
        %921 = vmatpush1.msra.mxu0 0.0
        %922 = vmatprep.subr.mxu0 0.0
        %923 = vmatpush1.msra.mxu0 0.0
        %924 = vmatprep.subr.mxu0 0.0
        %925 = vmatpush1.msra.mxu0 0.0
        %926 = vmatprep.subr.mxu0 0.0
        %927 = vmatpush1.msra.mxu0 0.0
        %928 = vmatprep.subr.mxu0 0.0
        %929 = vmatpush1.msra.mxu0 0.0
        %930 = vmatprep.subr.mxu0 0.0
        %931 = vmatpush1.msra.mxu0 0.0
        %932 = vmatprep.subr.mxu0 0.0
        %933 = vmatpush1.msra.mxu0 0.0
        %934 = vmatprep.subr.mxu0 0.0
        %935 = vmatpush1.msra.mxu0 0.0
        %936 = vmatprep.subr.mxu0 0.0
        %937 = vmatpush1.msra.mxu0 0.0
        %938 = vmatprep.subr.mxu0 0.0
        %939 = vmatpush1.msra.mxu0 %v903
        %940 = vmatprep.subr.mxu0 0.0
        %941 = vmatpush2.msra.mxu0 0.0
        %942 = vmatprep.subr.mxu0 0.0
        %943 = vmatpush2.msra.mxu0 0.0
        %944 = vmatprep.subr.mxu0 0.0
        %945 = vmatpush2.msra.mxu0 0.0
        %946 = vmatprep.subr.mxu0 0.0
        %947 = vmatpush2.msra.mxu0 0.0
        %948 = vmatprep.subr.mxu0 0.0
        %949 = vmatpush2.msra.mxu0 0.0
        %950 = vmatprep.subr.mxu0 0.0
        %951 = vmatpush2.msra.mxu0 0.0
        %952 = vmatprep.subr.mxu0 0.0
        %953 = vmatpush2.msra.mxu0 0.0
        %954 = vmatprep.subr.mxu0 0.0
        %955 = vmatpush2.msra.mxu0 0.0
        %956 = vmatprep.subr.mxu0 0.0
        %957 = vmatpush2.msra.mxu0 0.0
        %958 = vmatprep.subr.mxu0 0.0
        %959 = vmatpush2.msra.mxu0 0.0
        %960 = vmatprep.subr.mxu0 0.0
        %961 = vmatpush2.msra.mxu0 0.0
        %962 = vmatprep.subr.mxu0 0.0
        %963 = vmatpush2.msra.mxu0 0.0
        %964 = vmatprep.subr.mxu0 0.0
        %965 = vmatpush2.msra.mxu0 0.0
        %966 = vmatprep.subr.mxu0 0.0
        %967 = vmatpush2.msra.mxu0 0.0
        %968 = vmatprep.subr.mxu0 0.0
        %969 = vmatpush2.msra.mxu0 0.0
        %970 = vmatprep.subr.mxu0 0.0
        %971 = vmatpush2.msra.mxu0 0.0
        %972 = vmatprep.mubr.f32.mxu0 0.0
        %973 = vmatmul.mubr.f32.gmra.mxu0 %v906
        %v974 = vpop.f32.mrf.mxu0
        %v975 = vadd.f32 0.0, %v974
        %v976 = vpop.f32.mrf.mxu0
        %977 = vdwg.mxu0
        %v979 = vsel %vm334, %v975, 0
        %981 = vmatprep.subr.mxu0 0.0
        %982 = vmatpush1.msra.mxu0 0.0
        %983 = vmatprep.subr.mxu0 0.0
        %984 = vmatpush1.msra.mxu0 0.0
        %985 = vmatprep.subr.mxu0 0.0
        %986 = vmatpush1.msra.mxu0 0.0
        %987 = vmatprep.subr.mxu0 0.0
        %988 = vmatpush1.msra.mxu0 0.0
        %989 = vmatprep.subr.mxu0 0.0
        %990 = vmatpush1.msra.mxu0 0.0
        %991 = vmatprep.subr.mxu0 0.0
        %992 = vmatpush1.msra.mxu0 0.0
        %993 = vmatprep.subr.mxu0 0.0
        %994 = vmatpush1.msra.mxu0 0.0
        %995 = vmatprep.subr.mxu0 0.0
        %996 = vmatpush1.msra.mxu0 0.0
        %997 = vmatprep.subr.mxu0 0.0
        %998 = vmatpush1.msra.mxu0 0.0
        %999 = vmatprep.subr.mxu0 0.0
        %1000 = vmatpush1.msra.mxu0 0.0
        %1001 = vmatprep.subr.mxu0 0.0
        %1002 = vmatpush1.msra.mxu0 0.0
        %1003 = vmatprep.subr.mxu0 0.0
        %1004 = vmatpush1.msra.mxu0 0.0
        %1005 = vmatprep.subr.mxu0 0.0
        %1006 = vmatpush1.msra.mxu0 0.0
        %1007 = vmatprep.subr.mxu0 0.0
        %1008 = vmatpush1.msra.mxu0 0.0
        %1009 = vmatprep.subr.mxu0 0.0
        %1010 = vmatpush1.msra.mxu0 0.0
        %1011 = vmatprep.subr.mxu0 0.0
        %1012 = vmatpush1.msra.mxu0 %v329
        %1013 = vmatprep.subr.mxu0 0.0
        %1014 = vmatpush2.msra.mxu0 0.0
        %1015 = vmatprep.subr.mxu0 0.0
        %1016 = vmatpush2.msra.mxu0 0.0
        %1017 = vmatprep.subr.mxu0 0.0
        %1018 = vmatpush2.msra.mxu0 0.0
        %1019 = vmatprep.subr.mxu0 0.0
        %1020 = vmatpush2.msra.mxu0 0.0
        %1021 = vmatprep.subr.mxu0 0.0
        %1022 = vmatpush2.msra.mxu0 0.0
        %1023 = vmatprep.subr.mxu0 0.0
        %1024 = vmatpush2.msra.mxu0 0.0
        %1025 = vmatprep.subr.mxu0 0.0
        %1026 = vmatpush2.msra.mxu0 0.0
        %1027 = vmatprep.subr.mxu0 0.0
        %1028 = vmatpush2.msra.mxu0 0.0
        %1029 = vmatprep.subr.mxu0 0.0
        %1030 = vmatpush2.msra.mxu0 0.0
        %1031 = vmatprep.subr.mxu0 0.0
        %1032 = vmatpush2.msra.mxu0 0.0
        %1033 = vmatprep.subr.mxu0 0.0
        %1034 = vmatpush2.msra.mxu0 0.0
        %1035 = vmatprep.subr.mxu0 0.0
        %1036 = vmatpush2.msra.mxu0 0.0
        %1037 = vmatprep.subr.mxu0 0.0
        %1038 = vmatpush2.msra.mxu0 0.0
        %1039 = vmatprep.subr.mxu0 0.0
        %1040 = vmatpush2.msra.mxu0 0.0
        %1041 = vmatprep.subr.mxu0 0.0
        %1042 = vmatpush2.msra.mxu0 0.0
        %1043 = vmatprep.subr.mxu0 0.0
        %1044 = vmatpush2.msra.mxu0 0.0
        %1045 = vmatprep.mubr.f32.mxu0 0.0
        %1046 = vmatmul.mubr.f32.gmra.mxu0 %v979
        %v1047 = vpop.f32.mrf.mxu0
        %v1048 = vadd.f32 0.0, %v1047
        %v1049 = vpop.f32.mrf.mxu0
        %1050 = vdwg.mxu0
        %v1051 = vadd.f32 %v808, %v1048
        %1052 = vrot.lane.b32.xlu0 %v318, 104
        %v1053 = vpop.permute.xlu0 %1052
        %1054 = vrot.lane.b32.xlu0 %v318, 72
        %v1055 = vpop.permute.xlu0 %1054
        %v1056 = vsel %vm334, %v1053, 0
        %v1058 = vsel %vm334, %v1055, 0
        %1060 = vmatprep.subr.mxu0 0.0
        %1061 = vmatpush1.xpose.msra.mxu0 0.0
        %1062 = vmatprep.subr.mxu0 0.0
        %1063 = vmatpush1.xpose.msra.mxu0 0.0
        %1064 = vmatprep.subr.mxu0 0.0
        %1065 = vmatpush1.xpose.msra.mxu0 0.0
        %1066 = vmatprep.subr.mxu0 0.0
        %1067 = vmatpush1.xpose.msra.mxu0 0.0
        %1068 = vmatprep.subr.mxu0 0.0
        %1069 = vmatpush1.xpose.msra.mxu0 0.0
        %1070 = vmatprep.subr.mxu0 0.0
        %1071 = vmatpush1.xpose.msra.mxu0 0.0
        %1072 = vmatprep.subr.mxu0 0.0
        %1073 = vmatpush1.xpose.msra.mxu0 0.0
        %1074 = vmatprep.subr.mxu0 0.0
        %1075 = vmatpush1.xpose.msra.mxu0 0.0
        %1076 = vmatprep.subr.mxu0 0.0
        %1077 = vmatpush1.xpose.msra.mxu0 0.0
        %1078 = vmatprep.subr.mxu0 0.0
        %1079 = vmatpush1.xpose.msra.mxu0 0.0
        %1080 = vmatprep.subr.mxu0 0.0
        %1081 = vmatpush1.xpose.msra.mxu0 0.0
        %1082 = vmatprep.subr.mxu0 0.0
        %1083 = vmatpush1.xpose.msra.mxu0 0.0
        %1084 = vmatprep.subr.mxu0 0.0
        %1085 = vmatpush1.xpose.msra.mxu0 0.0
        %1086 = vmatprep.subr.mxu0 0.0
        %1087 = vmatpush1.xpose.msra.mxu0 0.0
        %1088 = vmatprep.subr.mxu0 0.0
        %1089 = vmatpush1.xpose.msra.mxu0 0.0
        %1090 = vmatprep.subr.mxu0 0.0
        %1091 = vmatpush1.xpose.msra.mxu0 %v1058
        %1092 = vmatprep.subr.mxu0 0.0
        %1093 = vmatpush2.xpose.msra.mxu0 0.0
        %1094 = vmatprep.subr.mxu0 0.0
        %1095 = vmatpush2.xpose.msra.mxu0 0.0
        %1096 = vmatprep.subr.mxu0 0.0
        %1097 = vmatpush2.xpose.msra.mxu0 0.0
        %1098 = vmatprep.subr.mxu0 0.0
        %1099 = vmatpush2.xpose.msra.mxu0 0.0
        %1100 = vmatprep.subr.mxu0 0.0
        %1101 = vmatpush2.xpose.msra.mxu0 0.0
        %1102 = vmatprep.subr.mxu0 0.0
        %1103 = vmatpush2.xpose.msra.mxu0 0.0
        %1104 = vmatprep.subr.mxu0 0.0
        %1105 = vmatpush2.xpose.msra.mxu0 0.0
        %1106 = vmatprep.subr.mxu0 0.0
        %1107 = vmatpush2.xpose.msra.mxu0 0.0
        %1108 = vmatprep.subr.mxu0 0.0
        %1109 = vmatpush2.xpose.msra.mxu0 0.0
        %1110 = vmatprep.subr.mxu0 0.0
        %1111 = vmatpush2.xpose.msra.mxu0 0.0
        %1112 = vmatprep.subr.mxu0 0.0
        %1113 = vmatpush2.xpose.msra.mxu0 0.0
        %1114 = vmatprep.subr.mxu0 0.0
        %1115 = vmatpush2.xpose.msra.mxu0 0.0
        %1116 = vmatprep.subr.mxu0 0.0
        %1117 = vmatpush2.xpose.msra.mxu0 0.0
        %1118 = vmatprep.subr.mxu0 0.0
        %1119 = vmatpush2.xpose.msra.mxu0 0.0
        %1120 = vmatprep.subr.mxu0 0.0
        %1121 = vmatpush2.xpose.msra.mxu0 0.0
        %1122 = vmatprep.subr.mxu0 0.0
        %1123 = vmatpush2.xpose.msra.mxu0 0.0
        %1124 = vmatprep.mubr.f32.mxu0 0.0
        %1125 = vmatmul.mubr.f32.gmra.mxu0 %v1056
        %v1126 = vpop.f32.mrf.mxu0
        %v1127 = vadd.f32 0.0, %v1126
        %v1128 = vpop.f32.mrf.mxu0
        %1129 = vdwg.mxu0
        %v1130 = vmul.f32 %v1127, 0.17677669
        %v1131 = vadd.f32 %v1130, %v326
        %v1132 = vsel %vm334, %v1131, -inf
        %1133 = vmax.xlane.f32.xlu0 %v1132
        %v1134 = vpop.xlane.xlu0 %1133
        %v1135 = vsub.f32 %v1131, %v1134
        %v1136 = vmul.f32 %v1135, 1.442695
        %v1137 = vpow.pop %v1136
        %v1138 = vsel %vm334, %v1137, 0.0
        %1139 = vadd.xlane.f32.xlu0 %v1138
        %v1140 = vpop.xlane.xlu0 %1139
        %v1141 = vrcp.pop %v1140
        %v1142 = vmul.f32 %v1137, %v1141
        %1143 = vrot.lane.b32.xlu0 %v318, 40
        %v1144 = vpop.permute.xlu0 %1143
        %v1147 = vsel %vm334, %v1142, 0
        %1149 = vmatprep.subr.mxu0 0.0
        %1150 = vmatpush1.msra.mxu0 0.0
        %1151 = vmatprep.subr.mxu0 0.0
        %1152 = vmatpush1.msra.mxu0 0.0
        %1153 = vmatprep.subr.mxu0 0.0
        %1154 = vmatpush1.msra.mxu0 0.0
        %1155 = vmatprep.subr.mxu0 0.0
        %1156 = vmatpush1.msra.mxu0 0.0
        %1157 = vmatprep.subr.mxu0 0.0
        %1158 = vmatpush1.msra.mxu0 0.0
        %1159 = vmatprep.subr.mxu0 0.0
        %1160 = vmatpush1.msra.mxu0 0.0
        %1161 = vmatprep.subr.mxu0 0.0
        %1162 = vmatpush1.msra.mxu0 0.0
        %1163 = vmatprep.subr.mxu0 0.0
        %1164 = vmatpush1.msra.mxu0 0.0
        %1165 = vmatprep.subr.mxu0 0.0
        %1166 = vmatpush1.msra.mxu0 0.0
        %1167 = vmatprep.subr.mxu0 0.0
        %1168 = vmatpush1.msra.mxu0 0.0
        %1169 = vmatprep.subr.mxu0 0.0
        %1170 = vmatpush1.msra.mxu0 0.0
        %1171 = vmatprep.subr.mxu0 0.0
        %1172 = vmatpush1.msra.mxu0 0.0
        %1173 = vmatprep.subr.mxu0 0.0
        %1174 = vmatpush1.msra.mxu0 0.0
        %1175 = vmatprep.subr.mxu0 0.0
        %1176 = vmatpush1.msra.mxu0 0.0
        %1177 = vmatprep.subr.mxu0 0.0
        %1178 = vmatpush1.msra.mxu0 0.0
        %1179 = vmatprep.subr.mxu0 0.0
        %1180 = vmatpush1.msra.mxu0 %v1144
        %1181 = vmatprep.subr.mxu0 0.0
        %1182 = vmatpush2.msra.mxu0 0.0
        %1183 = vmatprep.subr.mxu0 0.0
        %1184 = vmatpush2.msra.mxu0 0.0
        %1185 = vmatprep.subr.mxu0 0.0
        %1186 = vmatpush2.msra.mxu0 0.0
        %1187 = vmatprep.subr.mxu0 0.0
        %1188 = vmatpush2.msra.mxu0 0.0
        %1189 = vmatprep.subr.mxu0 0.0
        %1190 = vmatpush2.msra.mxu0 0.0
        %1191 = vmatprep.subr.mxu0 0.0
        %1192 = vmatpush2.msra.mxu0 0.0
        %1193 = vmatprep.subr.mxu0 0.0
        %1194 = vmatpush2.msra.mxu0 0.0
        %1195 = vmatprep.subr.mxu0 0.0
        %1196 = vmatpush2.msra.mxu0 0.0
        %1197 = vmatprep.subr.mxu0 0.0
        %1198 = vmatpush2.msra.mxu0 0.0
        %1199 = vmatprep.subr.mxu0 0.0
        %1200 = vmatpush2.msra.mxu0 0.0
        %1201 = vmatprep.subr.mxu0 0.0
        %1202 = vmatpush2.msra.mxu0 0.0
        %1203 = vmatprep.subr.mxu0 0.0
        %1204 = vmatpush2.msra.mxu0 0.0
        %1205 = vmatprep.subr.mxu0 0.0
        %1206 = vmatpush2.msra.mxu0 0.0
        %1207 = vmatprep.subr.mxu0 0.0
        %1208 = vmatpush2.msra.mxu0 0.0
        %1209 = vmatprep.subr.mxu0 0.0
        %1210 = vmatpush2.msra.mxu0 0.0
        %1211 = vmatprep.subr.mxu0 0.0
        %1212 = vmatpush2.msra.mxu0 0.0
        %1213 = vmatprep.mubr.f32.mxu0 0.0
        %1214 = vmatmul.mubr.f32.gmra.mxu0 %v1147
        %v1215 = vpop.f32.mrf.mxu0
        %v1216 = vadd.f32 0.0, %v1215
        %v1217 = vpop.f32.mrf.mxu0
        %1218 = vdwg.mxu0
        %v1220 = vsel %vm334, %v1216, 0
        %1222 = vmatprep.subr.mxu0 0.0
        %1223 = vmatpush1.msra.mxu0 0.0
        %1224 = vmatprep.subr.mxu0 0.0
        %1225 = vmatpush1.msra.mxu0 0.0
        %1226 = vmatprep.subr.mxu0 0.0
        %1227 = vmatpush1.msra.mxu0 0.0
        %1228 = vmatprep.subr.mxu0 0.0
        %1229 = vmatpush1.msra.mxu0 0.0
        %1230 = vmatprep.subr.mxu0 0.0
        %1231 = vmatpush1.msra.mxu0 0.0
        %1232 = vmatprep.subr.mxu0 0.0
        %1233 = vmatpush1.msra.mxu0 0.0
        %1234 = vmatprep.subr.mxu0 0.0
        %1235 = vmatpush1.msra.mxu0 0.0
        %1236 = vmatprep.subr.mxu0 0.0
        %1237 = vmatpush1.msra.mxu0 0.0
        %1238 = vmatprep.subr.mxu0 0.0
        %1239 = vmatpush1.msra.mxu0 0.0
        %1240 = vmatprep.subr.mxu0 0.0
        %1241 = vmatpush1.msra.mxu0 0.0
        %1242 = vmatprep.subr.mxu0 0.0
        %1243 = vmatpush1.msra.mxu0 0.0
        %1244 = vmatprep.subr.mxu0 0.0
        %1245 = vmatpush1.msra.mxu0 0.0
        %1246 = vmatprep.subr.mxu0 0.0
        %1247 = vmatpush1.msra.mxu0 0.0
        %1248 = vmatprep.subr.mxu0 0.0
        %1249 = vmatpush1.msra.mxu0 0.0
        %1250 = vmatprep.subr.mxu0 0.0
        %1251 = vmatpush1.msra.mxu0 0.0
        %1252 = vmatprep.subr.mxu0 0.0
        %1253 = vmatpush1.msra.mxu0 %v330
        %1254 = vmatprep.subr.mxu0 0.0
        %1255 = vmatpush2.msra.mxu0 0.0
        %1256 = vmatprep.subr.mxu0 0.0
        %1257 = vmatpush2.msra.mxu0 0.0
        %1258 = vmatprep.subr.mxu0 0.0
        %1259 = vmatpush2.msra.mxu0 0.0
        %1260 = vmatprep.subr.mxu0 0.0
        %1261 = vmatpush2.msra.mxu0 0.0
        %1262 = vmatprep.subr.mxu0 0.0
        %1263 = vmatpush2.msra.mxu0 0.0
        %1264 = vmatprep.subr.mxu0 0.0
        %1265 = vmatpush2.msra.mxu0 0.0
        %1266 = vmatprep.subr.mxu0 0.0
        %1267 = vmatpush2.msra.mxu0 0.0
        %1268 = vmatprep.subr.mxu0 0.0
        %1269 = vmatpush2.msra.mxu0 0.0
        %1270 = vmatprep.subr.mxu0 0.0
        %1271 = vmatpush2.msra.mxu0 0.0
        %1272 = vmatprep.subr.mxu0 0.0
        %1273 = vmatpush2.msra.mxu0 0.0
        %1274 = vmatprep.subr.mxu0 0.0
        %1275 = vmatpush2.msra.mxu0 0.0
        %1276 = vmatprep.subr.mxu0 0.0
        %1277 = vmatpush2.msra.mxu0 0.0
        %1278 = vmatprep.subr.mxu0 0.0
        %1279 = vmatpush2.msra.mxu0 0.0
        %1280 = vmatprep.subr.mxu0 0.0
        %1281 = vmatpush2.msra.mxu0 0.0
        %1282 = vmatprep.subr.mxu0 0.0
        %1283 = vmatpush2.msra.mxu0 0.0
        %1284 = vmatprep.subr.mxu0 0.0
        %1285 = vmatpush2.msra.mxu0 0.0
        %1286 = vmatprep.mubr.f32.mxu0 0.0
        %1287 = vmatmul.mubr.f32.gmra.mxu0 %v1220
        %v1288 = vpop.f32.mrf.mxu0
        %v1289 = vadd.f32 0.0, %v1288
        %v1290 = vpop.f32.mrf.mxu0
        %1291 = vdwg.mxu0
        %v1292 = vadd.f32 %v1051, %v1289
        %v1293 = vld [vmem:[%s3] sm:$0x1]
        %v1295 = vlaneseq
        %v1296 = vshrl.u32 %v1295, 7
        %v1297 = vsub.s32 0, %v1296
        %v1298 = vrot.slane %v1293, %v1297
        %v1300 = vadd.f32 %v1292, %v1298
        %1301 = vst.msk [vmem:[%s241] sm:$0xff] %vm247, %v1300
        %s1302 = sand.u32 %s119, 1
        %s1303 = scalar_lea.sflag [#allocation4], %s1302
        %s1304 = sand.u32 %s119, 1
        %s1305 = smul.addr %s1304, 8
        %s1306 = scalar_lea.vmem [#allocation8], %s1305
        // Predicated region
        $region49: #{tpu_custom_call.1} parent=35 // pred_check
          %p1307 = pneg %p129
        $region50: #{tpu_custom_call.1} parent=35 // pred_check_branch
          %1309 = sbr.rel (%p1307) target = $region52
        $region51: #{tpu_custom_call.1} parent=35 // pred_region
          %s1311 = ssub.s32 128, 128
          %1312 = vsyncadd %s1303, %s1311
          %s1313 = smul.addr %s22, 128
          %s1314 = scalar_lea.hbm %s4, %s1313
          %s1316 = sshll.u32 %s1306, 4
          %s1317 = int_to_ptr.vmem [resolvable:$true] %s1316
          %1319 = dma.vmem_to_hbm [thread:$0]  %s1317, 128, %s1314, %s1303
        $region52: #{tpu_custom_call.1} parent=35 // pred_fallthru
          _
      $region36: #{tpu_custom_call.1} parent=5 // pred_fallthru
        _
      %p1320 = scmp.le.s32.totalorder 2, %s17
      // Predicated region
      $region53: #{tpu_custom_call.1} parent=5 // pred_check
        %p1321 = pneg %p1320
      $region54: #{tpu_custom_call.1} parent=5 // pred_check_branch
        %1323 = sbr.rel (%p1321) target = $region56
      $region55: #{tpu_custom_call.1} parent=5 // pred_region
        %s1324 = ssub.s32 %s17, 2
        // Predicated region
        $region57: #{tpu_custom_call.1} parent=55 // pred_check
          %p1325 = pneg %p135
        $region58: #{tpu_custom_call.1} parent=55 // pred_check_branch
          %1327 = sbr.rel (%p1325) target = $region60
        $region59: #{tpu_custom_call.1} parent=55 // pred_region
          %s1328 = sand.u32 %s120, 1
          %s1329 = scalar_lea.sflag [#allocation4], %s1328
          %s1330 = sand.u32 %s120, 1
          %s1331 = smul.addr %s1330, 8
          %s1332 = scalar_lea.vmem [#allocation8], %s1331
          %1333 = dma.done %s1329, 128
        $region60: #{tpu_custom_call.1} parent=55 // pred_fallthru
          _
      $region56: #{tpu_custom_call.1} parent=5 // pred_fallthru
        _
    $region6: #{tpu_custom_call.1} parent=1 // loop_footer
      %s21 = sadd.s32 1, %s17
    $region7: #{tpu_custom_call.1} parent=1 // loop_footer_branch
      %16 = sbr.rel target = $region3
    $region8: #{tpu_custom_call.1} parent=1 // loop_exit
      _
    %1334 = vsyncpa [#allocation3], 1
    %s1335 = scalar_lea.sflag [#allocation3], 1
    %1336 = vsyncpa %s1335, 1
    %1337 = vsyncpa [#allocation6], 1
    %1338 = vsyncpa [#allocation4], 1
    %s1339 = scalar_lea.sflag [#allocation4], 1
    %1340 = vsyncpa %s1339, 1

</llo_original>
